<compile_context>
chip_gen: v5e
topology: v5e:2x2
jax: 0.10.0
libtpu: 0.0.40
codegen_flags: <defaults>
</compile_context>

<pallas_src>
import numpy as np
import jax
import jax.numpy as jnp
from jax.experimental import pallas as pl
from jax.experimental.pallas import tpu as pltpu

# ----------------------------- model dimensions ------------------------------
NUM_JOINTS = 32                       # SMAL body joints (excluding root)
NUM_TOTAL_JOINTS = NUM_JOINTS + 1     # 33, including global orientation joint
NUM_BETAS = 10
NUM_POSE_BASIS = NUM_JOINTS * 9       # 288
B = 2                                 # batch size
V = 512                               # synthetic vertex count (small, multiple of 128)
JPAD = 128                            # lane-padded joint dim (avoids masked stores)
ROWS3B = 3 * B                        # coordinate-slab rows: index = k*B + b


# ============================== Pallas kernels ================================
def _shape_pose_kernel(betas_ref, pf_ref, vt_ref, sd_ref, pd_ref, jr_ref,
                       vposed_ref, joints_ref):
    """Shape blend + pose blend + fused joint regression.

    Weights (sd/pd/jr) arrive as bf16; activations are cast to bf16 so every dot
    hits the native bf16 MXU path with f32 accumulation."""
    betas = betas_ref[...].astype(jnp.bfloat16)               # (B, NUM_BETAS)
    pf = pf_ref[...].astype(jnp.bfloat16)                      # (B, NUM_POSE_BASIS)

    # One wide (B, 3V) matmul each (lane-dense, index = k*V + v).
    v_shaped = vt_ref[...] + jnp.dot(betas, sd_ref[...],
                                     preferred_element_type=jnp.float32)   # (B, 3V) f32
    v_posed = v_shaped + jnp.dot(pf, pd_ref[...],
                                 preferred_element_type=jnp.float32)       # (B, 3V) f32

    # Relayout (B, 3V) -> (3B, V) coordinate-slab rows (row = k*B + b).
    vs6 = jnp.concatenate([v_shaped[:, 0:V], v_shaped[:, V:2 * V],
                           v_shaped[:, 2 * V:3 * V]], axis=0)               # (3B, V)
    vp6 = jnp.concatenate([v_posed[:, 0:V], v_posed[:, V:2 * V],
                           v_posed[:, 2 * V:3 * V]], axis=0)                # (3B, V)
    vposed_ref[...] = vp6

    # Single fused joint regression: (3B, V) @ (V, JPAD) -> (3B, JPAD).
    joints_ref[...] = jnp.dot(vs6.astype(jnp.bfloat16), jr_ref[...],
                              preferred_element_type=jnp.float32)


def _skinning_kernel(a_ref, wT_ref, vposed_ref, verts_ref):
    """T = A_cmaj @ W^T (single MXU dot, bottom 4x4 row dropped), then full-width
    (3B, V) slab FMAs and one lane-dense store."""
    Tall = jnp.dot(a_ref[...].astype(jnp.bfloat16), wT_ref[...],
                   preferred_element_type=jnp.float32)          # (4*3B, V) f32
    vp = vposed_ref[...]                                        # (3B, V), row = k*B + b
    n = ROWS3B

    vx = vp[0:B]                                                # (B, V) x-coords
    vy = vp[B:2 * B]
    vz = vp[2 * B:3 * B]
    VX = jnp.concatenate([vx, vx, vx], axis=0)                  # (3B, V)
    VY = jnp.concatenate([vy, vy, vy], axis=0)
    VZ = jnp.concatenate([vz, vz, vz], axis=0)

    # verts[k*B+b, v] = T[b,v,k,0]*vx + T[b,v,k,1]*vy + T[b,v,k,2]*vz + T[b,v,k,3]
    verts_ref[...] = (Tall[0:n] * VX + Tall[n:2 * n] * VY +
                      Tall[2 * n:3 * n] * VZ + Tall[3 * n:4 * n])


_VMEM_SPEC = pl.BlockSpec(memory_space=pltpu.MemorySpace.VMEM)


def shape_pose_pallas(betas, pose_feature, v_template_w, shapedirs_w, posedirs_w,
                      jreg_T_pad):
    # Grid-free single invocation: whole working set (< 1.5 MiB) lives in VMEM.
    return pl.pallas_call(
        _shape_pose_kernel,
        out_shape=(jax.ShapeDtypeStruct((ROWS3B, V), jnp.float32),       # v_posed6
                   jax.ShapeDtypeStruct((ROWS3B, JPAD), jnp.float32)),   # joints6
        in_specs=[_VMEM_SPEC] * 6,
        out_specs=(_VMEM_SPEC, _VMEM_SPEC),
    )(betas, pose_feature, v_template_w, shapedirs_w, posedirs_w, jreg_T_pad)


def skinning_pallas(A_cmaj, lbs_weights_T, v_posed6):
    return pl.pallas_call(
        _skinning_kernel,
        out_shape=jax.ShapeDtypeStruct((ROWS3B, V), jnp.float32),
        in_specs=[_VMEM_SPEC] * 3,
        out_specs=_VMEM_SPEC,
    )(A_cmaj, lbs_weights_T, v_posed6)


# ================================ JAX glue ====================================
def batch_rodrigues(rot_vecs, epsilon=1e-8):
    """Axis-angle (N,3) -> rotation matrices (N,3,3); matches smplx exactly."""
    n = rot_vecs.shape[0]
    angle = jnp.linalg.norm(rot_vecs + epsilon, axis=1, keepdims=True)   # (N,1)
    rot_dir = rot_vecs / angle
    cos = jnp.cos(angle)[:, None, :]
    sin = jnp.sin(angle)[:, None, :]
    rx, ry, rz = jnp.split(rot_dir, 3, axis=1)
    zeros = jnp.zeros((n, 1), dtype=rot_vecs.dtype)
    K = jnp.concatenate([zeros, -rz, ry, rz, zeros, -rx, -ry, rx, zeros],
                        axis=1).reshape(n, 3, 3)
    ident = jnp.eye(3, dtype=rot_vecs.dtype)[None]
    return ident + sin * K + (1.0 - cos) * jnp.matmul(K, K)


def batch_rigid_transform(rot_mats, joints, parents):
    """Kinematic chain; rot_mats (B,J,3,3), joints (B,J,3) -> posed joints, rel transforms.

    33 tiny 4x4 matmuls, statically unrolled over the (arbitrary-tree) parents
    array exactly as in the smplx reference; negligible next to the kernels."""
    bn, jn = joints.shape[:2]
    joints_u = joints[..., None]                                          # (B,J,3,1)
    rel_joints = joints_u.at[:, 1:].add(-joints_u[:, np.asarray(parents[1:])])
    bottom = jnp.broadcast_to(
        jnp.array([0.0, 0.0, 0.0, 1.0], joints.dtype).reshape(1, 1, 1, 4),
        (bn, jn, 1, 4))
    transforms_mat = jnp.concatenate(
        [jnp.concatenate([rot_mats, rel_joints], axis=-1), bottom], axis=-2)  # (B,J,4,4)
    chain = [transforms_mat[:, 0]]
    for i in range(1, jn):
        chain.append(jnp.matmul(chain[int(parents[i])], transforms_mat[:, i]))
    transforms = jnp.stack(chain, axis=1)
    posed_joints = transforms[:, :, :3, 3]
    joints_homo = jnp.concatenate(
        [joints_u, jnp.zeros((bn, jn, 1, 1), joints.dtype)], axis=2)
    rel = transforms - jnp.pad(jnp.matmul(transforms, joints_homo),
                               ((0, 0), (0, 0), (0, 0), (3, 0)))
    return posed_joints, rel


def smal_forward(params, betas, body_pose, global_orient, transl):
    """SMAL.forward(..., pose2rot=True, return_verts=True, return_full_pose=True)."""
    full_pose = jnp.concatenate([global_orient, body_pose], axis=1)       # (B, 99)
    rot_mats = batch_rodrigues(full_pose.reshape(-1, 3)).reshape(
        B, NUM_TOTAL_JOINTS, 3, 3)
    ident = jnp.eye(3, dtype=jnp.float32)
    pose_feature = (rot_mats[:, 1:] - ident).reshape(B, -1)               # (B, 288)

    # --- Pallas kernel 1: shape + pose blend, fused joint regression -----------
    v_posed6, joints6 = shape_pose_pallas(
        betas, pose_feature, params["v_template_w"], params["shapedirs_w"],
        params["posedirs_w"], params["J_regressor_T_pad"])
    j_rest = jnp.transpose(
        joints6[:, :NUM_TOTAL_JOINTS].reshape(3, B, NUM_TOTAL_JOINTS), (1, 2, 0))  # (B,J,3)

    # --- kinematic chain (tiny, sequential) -----------------------------------
    posed_joints, A = batch_rigid_transform(rot_mats, j_rest, params["parents"])
    # Drop the unused bottom row of each 4x4 and reorder coefficient-major:
    # A_cmaj[c*3B + k*B + b, j] = A[b, j, k, c]   -> (12B, J)
    A_cmaj = jnp.transpose(A[:, :, :3, :], (3, 2, 0, 1)).reshape(
        4 * ROWS3B, NUM_TOTAL_JOINTS)

    # --- Pallas kernel 2: linear blend skinning --------------------------------
    verts6 = skinning_pallas(A_cmaj, params["lbs_weights_T"], v_posed6)    # (3B, V)
    vertices = jnp.transpose(verts6.reshape(3, B, V), (1, 2, 0))           # (B, V, 3)

    # VertexJointSelector (use_hands=False, use_feet_keypoints=False): extra verts
    extra = vertices[:, params["extra_joint_idxs"], :]
    joints = jnp.concatenate([posed_joints, extra], axis=1)

    # apply_trans (transl member exists in SMAL.__init__)
    joints = joints + transl[:, None, :]
    vertices = vertices + transl[:, None, :]
    return vertices, joints, full_pose


# =========================== pure-JAX reference ===============================
def smal_forward_ref(std, betas, body_pose, global_orient, transl):
    full_pose = jnp.concatenate([global_orient, body_pose], axis=1)
    rot_mats = batch_rodrigues(full_pose.reshape(-1, 3)).reshape(
        B, NUM_TOTAL_JOINTS, 3, 3)
    pose_feature = (rot_mats[:, 1:] - jnp.eye(3, dtype=jnp.float32)).reshape(B, -1)

    v_shaped = std["v_template"][None] + jnp.einsum("bl,vkl->bvk", betas, std["shapedirs"])
    j_rest = jnp.einsum("jv,bvk->bjk", std["J_regressor"], v_shaped)
    pose_offsets = jnp.matmul(pose_feature, std["posedirs"]).reshape(B, V, 3)
    v_posed = v_shaped + pose_offsets
    posed_joints, A = batch_rigid_transform(rot_mats, j_rest, std["parents"])
    T = jnp.einsum("vj,bjmn->bvmn", std["lbs_weights"], A)
    v_homo = jnp.concatenate([v_posed, jnp.ones((B, V, 1), jnp.float32)], axis=2)
    verts = jnp.einsum("bvmn,bvn->bvm", T, v_homo)[:, :, :3]
    extra = verts[:, std["extra_joint_idxs"], :]
    joints = jnp.concatenate([posed_joints, extra], axis=1)
    return verts + transl[:, None, :], joints + transl[:, None, :]


# ================================== main ======================================
if __name__ == "__main__":
    key = jax.random.PRNGKey(0)
    keys = jax.random.split(key, 10)

    # Synthetic model buffers (deterministic; pickle loading has no Pallas role).
    v_template = jax.random.normal(keys[0], (V, 3), jnp.float32)
    shapedirs = 0.05 * jax.random.normal(keys[1], (V, 3, NUM_BETAS), jnp.float32)
    posedirs_raw = 0.01 * jax.random.normal(keys[2], (V, 3, NUM_POSE_BASIS), jnp.float32)
    posedirs = posedirs_raw.reshape(V * 3, NUM_POSE_BASIS).T              # (P, V*3), as in module
    J_regressor = jax.nn.softmax(
        jax.random.normal(keys[3], (NUM_TOTAL_JOINTS, V), jnp.float32), axis=1)
    lbs_weights = jax.nn.softmax(
        2.0 * jax.random.normal(keys[4], (V, NUM_TOTAL_JOINTS), jnp.float32), axis=1)
    parents = np.concatenate([np.array([-1]),
                              np.arange(NUM_TOTAL_JOINTS - 1)]).astype(np.int32)  # simple chain
    extra_joint_idxs = np.array([10, 26, 150, 300, 500], np.int32)  # synthetic VERTEX_IDS['smal']

    # Forward inputs (would be nn.Parameters betas/body_pose/global_orient/transl).
    betas = 0.5 * jax.random.normal(keys[5], (B, NUM_BETAS), jnp.float32)
    body_pose = 0.2 * jax.random.normal(keys[6], (B, NUM_JOINTS * 3), jnp.float32)
    global_orient = 0.2 * jax.random.normal(keys[7], (B, 3), jnp.float32)
    transl = 0.1 * jax.random.normal(keys[8], (B, 3), jnp.float32)

    # Coordinate-major, lane-dense kernel layouts (index along last axis = k*V + v).
    # Large constant operands are bf16 (DMA-bound at B=2; MXU is bf16-native with f32 acc,
    # and default MXU precision already truncated f32 operands to bf16).
    kernel_params = dict(
        v_template_w=jnp.transpose(v_template, (1, 0)).reshape(1, 3 * V),           # (1, 3V) f32
        shapedirs_w=jnp.transpose(shapedirs, (2, 1, 0)).reshape(
            NUM_BETAS, 3 * V).astype(jnp.bfloat16),                                  # (NB, 3V) bf16
        posedirs_w=jnp.transpose(posedirs_raw, (2, 1, 0)).reshape(
            NUM_POSE_BASIS, 3 * V).astype(jnp.bfloat16),                             # (P, 3V) bf16
        J_regressor_T_pad=jnp.pad(jnp.transpose(J_regressor, (1, 0)),
                                  ((0, 0), (0, JPAD - NUM_TOTAL_JOINTS))
                                  ).astype(jnp.bfloat16),                             # (V, 128) bf16
        lbs_weights_T=jnp.transpose(lbs_weights, (1, 0)).astype(jnp.bfloat16),        # (J, V) bf16
        parents=parents,
        extra_joint_idxs=extra_joint_idxs,
    )

    fwd = jax.jit(lambda b, p, g, t: smal_forward(kernel_params, b, p, g, t))
    vertices, joints, full_pose = fwd(betas, body_pose, global_orient, transl)
    jax.block_until_ready((vertices, joints, full_pose))

    std = dict(v_template=v_template, shapedirs=shapedirs, posedirs=posedirs,
               J_regressor=J_regressor, lbs_weights=lbs_weights,
               parents=parents, extra_joint_idxs=extra_joint_idxs)
    verts_exp, joints_exp = smal_forward_ref(std, betas, body_pose, global_orient, transl)

    np.testing.assert_allclose(np.asarray(vertices), np.asarray(verts_exp),
                               rtol=2e-2, atol=2e-2)
    np.testing.assert_allclose(np.asarray(joints), np.asarray(joints_exp),
                               rtol=2e-2, atol=2e-2)
    # TODO(synk): pickle/Struct model loading, nn.Parameter registration and
    # joint_mapper have no kernel equivalent; parameters are synthesized above.
    print("KERNEL_OK")
</pallas_src>

<mosaic_0001>
module attributes {stable_mosaic.version = 11 : i64} {
  func.func @_shape_pose_kernel(%arg0: memref<2x10xf32, #tpu.memory_space<vmem>>, %arg1: memref<2x288xf32, #tpu.memory_space<vmem>>, %arg2: memref<1x1536xf32, #tpu.memory_space<vmem>>, %arg3: memref<10x1536xbf16, #tpu.memory_space<vmem>>, %arg4: memref<288x1536xbf16, #tpu.memory_space<vmem>>, %arg5: memref<512x128xbf16, #tpu.memory_space<vmem>>, %arg6: memref<6x512xf32, #tpu.memory_space<vmem>>, %arg7: memref<6x128xf32, #tpu.memory_space<vmem>>) attributes {dimension_semantics = [], scalar_prefetch = 0 : i64, scratch_operands = 0 : i64, tpu.core_type = #tpu.core_type<tc>} {
    %c0 = arith.constant 0 : index
    %c0_0 = arith.constant 0 : index
    %0 = vector.load %arg0[%c0, %c0_0] : memref<2x10xf32, #tpu.memory_space<vmem>>, vector<2x10xf32>
    %1 = arith.truncf %0 : vector<2x10xf32> to vector<2x10xbf16>
    %c0_1 = arith.constant 0 : index
    %c0_2 = arith.constant 0 : index
    %2 = vector.load %arg1[%c0_1, %c0_2] : memref<2x288xf32, #tpu.memory_space<vmem>>, vector<2x288xf32>
    %3 = arith.truncf %2 : vector<2x288xf32> to vector<2x288xbf16>
    %c0_3 = arith.constant 0 : index
    %c0_4 = arith.constant 0 : index
    %4 = vector.load %arg2[%c0_3, %c0_4] : memref<1x1536xf32, #tpu.memory_space<vmem>>, vector<1x1536xf32>
    %c0_5 = arith.constant 0 : index
    %c0_6 = arith.constant 0 : index
    %5 = vector.load %arg3[%c0_5, %c0_6] : memref<10x1536xbf16, #tpu.memory_space<vmem>>, vector<10x1536xbf16>
    %cst = arith.constant dense<0.000000e+00> : vector<2x1536xf32>
    %6 = tpu.matmul %1, %5, %cst {dimension_numbers = #tpu.dot_dimension_numbers<[1], [0], [0], [1], [0, 0, 1, 1], [], []>} : vector<2x10xbf16>, vector<10x1536xbf16>, vector<2x1536xf32> -> vector<2x1536xf32>
    %7 = vector.broadcast %4 : vector<1x1536xf32> to vector<2x1536xf32>
    %8 = arith.addf %7, %6 : vector<2x1536xf32>
    %c0_7 = arith.constant 0 : index
    %c0_8 = arith.constant 0 : index
    %9 = vector.load %arg4[%c0_7, %c0_8] : memref<288x1536xbf16, #tpu.memory_space<vmem>>, vector<288x1536xbf16>
    %cst_9 = arith.constant dense<0.000000e+00> : vector<2x1536xf32>
    %10 = tpu.matmul %3, %9, %cst_9 {dimension_numbers = #tpu.dot_dimension_numbers<[1], [0], [0], [1], [0, 0, 1, 1], [], []>} : vector<2x288xbf16>, vector<288x1536xbf16>, vector<2x1536xf32> -> vector<2x1536xf32>
    %11 = arith.addf %8, %10 : vector<2x1536xf32>
    %12 = vector.extract_strided_slice %8 {offsets = [0, 0], sizes = [2, 512], strides = [1, 1]} : vector<2x1536xf32> to vector<2x512xf32>
    %13 = vector.extract_strided_slice %8 {offsets = [0, 512], sizes = [2, 512], strides = [1, 1]} : vector<2x1536xf32> to vector<2x512xf32>
    %14 = vector.extract_strided_slice %8 {offsets = [0, 1024], sizes = [2, 512], strides = [1, 1]} : vector<2x1536xf32> to vector<2x512xf32>
    %15 = tpu.concatenate %12, %13, %14 in 0 : vector<2x512xf32>, vector<2x512xf32>, vector<2x512xf32> -> vector<6x512xf32>
    %16 = vector.extract_strided_slice %11 {offsets = [0, 0], sizes = [2, 512], strides = [1, 1]} : vector<2x1536xf32> to vector<2x512xf32>
    %17 = vector.extract_strided_slice %11 {offsets = [0, 512], sizes = [2, 512], strides = [1, 1]} : vector<2x1536xf32> to vector<2x512xf32>
    %18 = vector.extract_strided_slice %11 {offsets = [0, 1024], sizes = [2, 512], strides = [1, 1]} : vector<2x1536xf32> to vector<2x512xf32>
    %19 = tpu.concatenate %16, %17, %18 in 0 : vector<2x512xf32>, vector<2x512xf32>, vector<2x512xf32> -> vector<6x512xf32>
    %c0_10 = arith.constant 0 : index
    %c0_11 = arith.constant 0 : index
    %20 = vector.load %arg6[%c0_10, %c0_11] : memref<6x512xf32, #tpu.memory_space<vmem>>, vector<6x512xf32>
    tpu.vector_store %arg6[%c0_10, %c0_11], %19 {strides = array<i32>} : memref<6x512xf32, #tpu.memory_space<vmem>>, vector<6x512xf32>,
    %21 = arith.truncf %15 : vector<6x512xf32> to vector<6x512xbf16>
    %c0_12 = arith.constant 0 : index
    %c0_13 = arith.constant 0 : index
    %22 = vector.load %arg5[%c0_12, %c0_13] : memref<512x128xbf16, #tpu.memory_space<vmem>>, vector<512x128xbf16>
    %cst_14 = arith.constant dense<0.000000e+00> : vector<6x128xf32>
    %23 = tpu.matmul %21, %22, %cst_14 {dimension_numbers = #tpu.dot_dimension_numbers<[1], [0], [0], [1], [0, 0, 1, 1], [], []>} : vector<6x512xbf16>, vector<512x128xbf16>, vector<6x128xf32> -> vector<6x128xf32>
    %c0_15 = arith.constant 0 : index
    %c0_16 = arith.constant 0 : index
    %24 = vector.load %arg7[%c0_15, %c0_16] : memref<6x128xf32, #tpu.memory_space<vmem>>, vector<6x128xf32>
    tpu.vector_store %arg7[%c0_15, %c0_16], %23 {strides = array<i32>} : memref<6x128xf32, #tpu.memory_space<vmem>>, vector<6x128xf32>,
    return
  }
}

module attributes {stable_mosaic.version = 11 : i64} {
  func.func @_skinning_kernel(%arg0: memref<24x33xf32, #tpu.memory_space<vmem>>, %arg1: memref<33x512xbf16, #tpu.memory_space<vmem>>, %arg2: memref<6x512xf32, #tpu.memory_space<vmem>>, %arg3: memref<6x512xf32, #tpu.memory_space<vmem>>) attributes {dimension_semantics = [], scalar_prefetch = 0 : i64, scratch_operands = 0 : i64, tpu.core_type = #tpu.core_type<tc>} {
    %c0 = arith.constant 0 : index
    %c0_0 = arith.constant 0 : index
    %0 = vector.load %arg0[%c0, %c0_0] : memref<24x33xf32, #tpu.memory_space<vmem>>, vector<24x33xf32>
    %1 = arith.truncf %0 : vector<24x33xf32> to vector<24x33xbf16>
    %c0_1 = arith.constant 0 : index
    %c0_2 = arith.constant 0 : index
    %2 = vector.load %arg1[%c0_1, %c0_2] : memref<33x512xbf16, #tpu.memory_space<vmem>>, vector<33x512xbf16>
    %cst = arith.constant dense<0.000000e+00> : vector<24x512xf32>
    %3 = tpu.matmul %1, %2, %cst {dimension_numbers = #tpu.dot_dimension_numbers<[1], [0], [0], [1], [0, 0, 1, 1], [], []>} : vector<24x33xbf16>, vector<33x512xbf16>, vector<24x512xf32> -> vector<24x512xf32>
    %c0_3 = arith.constant 0 : index
    %c0_4 = arith.constant 0 : index
    %4 = vector.load %arg2[%c0_3, %c0_4] : memref<6x512xf32, #tpu.memory_space<vmem>>, vector<6x512xf32>
    %5 = vector.extract_strided_slice %4 {offsets = [0, 0], sizes = [2, 512], strides = [1, 1]} : vector<6x512xf32> to vector<2x512xf32>
    %6 = vector.extract_strided_slice %4 {offsets = [2, 0], sizes = [2, 512], strides = [1, 1]} : vector<6x512xf32> to vector<2x512xf32>
    %7 = vector.extract_strided_slice %4 {offsets = [4, 0], sizes = [2, 512], strides = [1, 1]} : vector<6x512xf32> to vector<2x512xf32>
    %8 = tpu.concatenate %5, %5, %5 in 0 : vector<2x512xf32>, vector<2x512xf32>, vector<2x512xf32> -> vector<6x512xf32>
    %9 = tpu.concatenate %6, %6, %6 in 0 : vector<2x512xf32>, vector<2x512xf32>, vector<2x512xf32> -> vector<6x512xf32>
    %10 = tpu.concatenate %7, %7, %7 in 0 : vector<2x512xf32>, vector<2x512xf32>, vector<2x512xf32> -> vector<6x512xf32>
    %11 = vector.extract_strided_slice %3 {offsets = [0, 0], sizes = [6, 512], strides = [1, 1]} : vector<24x512xf32> to vector<6x512xf32>
    %12 = arith.mulf %11, %8 : vector<6x512xf32>
    %13 = vector.extract_strided_slice %3 {offsets = [6, 0], sizes = [6, 512], strides = [1, 1]} : vector<24x512xf32> to vector<6x512xf32>
    %14 = arith.mulf %13, %9 : vector<6x512xf32>
    %15 = arith.addf %12, %14 : vector<6x512xf32>
    %16 = vector.extract_strided_slice %3 {offsets = [12, 0], sizes = [6, 512], strides = [1, 1]} : vector<24x512xf32> to vector<6x512xf32>
    %17 = arith.mulf %16, %10 : vector<6x512xf32>
    %18 = arith.addf %15, %17 : vector<6x512xf32>
    %19 = vector.extract_strided_slice %3 {offsets = [18, 0], sizes = [6, 512], strides = [1, 1]} : vector<24x512xf32> to vector<6x512xf32>
    %20 = arith.addf %18, %19 : vector<6x512xf32>
    %c0_5 = arith.constant 0 : index
    %c0_6 = arith.constant 0 : index
    %21 = vector.load %arg3[%c0_5, %c0_6] : memref<6x512xf32, #tpu.memory_space<vmem>>, vector<6x512xf32>
    tpu.vector_store %arg3[%c0_5, %c0_6], %20 {strides = array<i32>} : memref<6x512xf32, #tpu.memory_space<vmem>>, vector<6x512xf32>,
    return
  }
}

</mosaic_0001>

<llo_original>
// kernel: _lambda_.2
$region0: #{_lambda_.2}
  #allocation0 [shape = 'u32[]', space=smem, size = 0x4, offset = 0x4, fixed_abs, tag = 'smem constant byte address 0x4 - core index']
  #allocation1 [shape = 'u32[72,128]{1,0:T(1,128)}', space=vmem, size = 0x9000, scoped, tag = 'internal scratch']
  %s0 = inlined_call_operand.vmem [shape: f32[2,10], index: 0, kind: input, shape index: {}]
  %s1 = inlined_call_operand.vmem [shape: f32[2,288], index: 1, kind: input, shape index: {}]
  %s2 = inlined_call_operand.vmem [shape: f32[1,1536], index: 2, kind: input, shape index: {}]
  %s3 = inlined_call_operand.vmem [shape: bf16[10,1536], index: 3, kind: input, shape index: {}]
  %s4 = inlined_call_operand.vmem [shape: bf16[288,1536], index: 4, kind: input, shape index: {}]
  %s5 = inlined_call_operand.vmem [shape: bf16[512,128], index: 5, kind: input, shape index: {}]
  %s6 = inlined_call_operand.vmem [shape: f32[6,512], index: 6, kind: output, shape index: {0}]
  %s7 = inlined_call_operand.vmem [shape: f32[6,128], index: 7, kind: output, shape index: {1}]
  %8 = xla_tuple %s6, %s7
  %s9 = sld [smem:[#allocation0]]
  $region42: #{_lambda_.2} parent=0
    _
  %s11 = ssub.s32 1, %s9
  %s12 = scalar_select 0, %s11, %s9
  // Predicated region
  $region2: #{_lambda_.2} parent=0 // pred_check
    _
  $region3: #{_lambda_.2} parent=0 // pred_check_branch
    %14 = sbr.rel (0) target = $region5
  $region4: #{_lambda_.2} parent=0 // pred_region
    _
  $region5: #{_lambda_.2} parent=0 // pred_fallthru
    _
  // Predicated region
  $region6: #{_lambda_.2} parent=0 // pred_check
    _
  $region7: #{_lambda_.2} parent=0 // pred_check_branch
    %16 = sbr.rel (0) target = $region9
  $region8: #{_lambda_.2} parent=0 // pred_region
    _
  $region9: #{_lambda_.2} parent=0 // pred_fallthru
    _
  // Predicated region
  $region10: #{_lambda_.2} parent=0 // pred_check
    _
  $region11: #{_lambda_.2} parent=0 // pred_check_branch
    %18 = sbr.rel (0) target = $region13
  $region12: #{_lambda_.2} parent=0 // pred_region
    _
  $region13: #{_lambda_.2} parent=0 // pred_fallthru
    _
  // Predicated region
  $region14: #{_lambda_.2} parent=0 // pred_check
    _
  $region15: #{_lambda_.2} parent=0 // pred_check_branch
    %20 = sbr.rel (0) target = $region17
  $region16: #{_lambda_.2} parent=0 // pred_region
    _
  $region17: #{_lambda_.2} parent=0 // pred_fallthru
    _
  // Predicated region
  $region18: #{_lambda_.2} parent=0 // pred_check
    _
  $region19: #{_lambda_.2} parent=0 // pred_check_branch
    %22 = sbr.rel (0) target = $region21
  $region20: #{_lambda_.2} parent=0 // pred_region
    _
  $region21: #{_lambda_.2} parent=0 // pred_fallthru
    _
  // Predicated region
  $region22: #{_lambda_.2} parent=0 // pred_check
    _
  $region23: #{_lambda_.2} parent=0 // pred_check_branch
    %24 = sbr.rel (0) target = $region25
  $region24: #{_lambda_.2} parent=0 // pred_region
    _
  $region25: #{_lambda_.2} parent=0 // pred_fallthru
    _
  %v26 = vld [vmem:[%s0] sm:$0x3]
  %v27 = vpack.c.bf16 %v26, %v26
  %v28 = vld [vmem:[%s1] sm:$0x3f]
  %30 = vst [vmem:[#allocation1] ss:$4 sm:$0xff] %v28
  %v31 = vld.sshfl [vmem:[#allocation1] sm:$0xff pattern:$0x73625140]
  %v32 = vld.sshfl [vmem:[#allocation1 + $0x8] sm:$0xff pattern:$0x73625140]
  %v33 = vld.sshfl [vmem:[#allocation1 + $0x10] sm:$0xff pattern:$0x73625140]
  %v37 = vpack.c.bf16 %v31, %v31
  %v38 = vpack.c.bf16 %v32, %v32
  %v39 = vpack.c.bf16 %v33, %v33
  %v40 = vld [vmem:[%s2] sm:$0xff]
  %v41 = vld [vmem:[%s2 + $0x8] sm:$0xf]
  %v42 = vld [vmem:[%s3] sm:$0xff]
  %v43 = vld [vmem:[%s3 + $0x8] sm:$0xff]
  %v44 = vld [vmem:[%s3 + $0x10] sm:$0xff]
  %v45 = vld [vmem:[%s3 + $0x18] sm:$0xff]
  %v46 = vld [vmem:[%s3 + $0x20] sm:$0xff]
  %v47 = vld [vmem:[%s3 + $0x28] sm:$0xff]
  %v48 = vld [vmem:[%s3 + $0x30] sm:$0x11]
  %v49 = vld [vmem:[%s3 + $0x38] sm:$0x11]
  %v50 = vld [vmem:[%s3 + $0x40] sm:$0x11]
  %v51 = vld [vmem:[%s3 + $0x48] sm:$0x11]
  %v52 = vld [vmem:[%s3 + $0x50] sm:$0x11]
  %v53 = vld [vmem:[%s3 + $0x58] sm:$0x11]
  %v66 = vunpack.c.l.b16 %v42
  %v67 = vunpack.c.h.b16 %v42
  %v68 = vunpack.c.l.b16 %v43
  %v69 = vunpack.c.h.b16 %v43
  %v70 = vunpack.c.l.b16 %v44
  %v71 = vunpack.c.h.b16 %v44
  %v72 = vunpack.c.l.b16 %v45
  %v73 = vunpack.c.h.b16 %v45
  %v74 = vunpack.c.l.b16 %v46
  %v75 = vunpack.c.h.b16 %v46
  %v76 = vunpack.c.l.b16 %v47
  %v77 = vunpack.c.h.b16 %v47
  %v78 = vunpack.c.l.b16 %v48
  %v79 = vunpack.c.h.b16 %v48
  %v80 = vunpack.c.l.b16 %v49
  %v81 = vunpack.c.h.b16 %v49
  %v82 = vunpack.c.l.b16 %v50
  %v83 = vunpack.c.h.b16 %v50
  %v84 = vunpack.c.l.b16 %v51
  %v85 = vunpack.c.h.b16 %v51
  %v86 = vunpack.c.l.b16 %v52
  %v87 = vunpack.c.h.b16 %v52
  %v88 = vunpack.c.l.b16 %v53
  %v89 = vunpack.c.h.b16 %v53
  %v90 = vpack.c.b16 %v78, %v66
  %v91 = vpack.c.b16 %v79, %v67
  %v92 = vpack.c.b16 %v80, %v68
  %v93 = vpack.c.b16 %v81, %v69
  %v94 = vpack.c.b16 %v82, %v70
  %v95 = vpack.c.b16 %v83, %v71
  %v96 = vpack.c.b16 %v84, %v72
  %v97 = vpack.c.b16 %v85, %v73
  %v98 = vpack.c.b16 %v86, %v74
  %v99 = vpack.c.b16 %v87, %v75
  %v100 = vpack.c.b16 %v88, %v76
  %v101 = vpack.c.b16 %v89, %v77
  %vm102 = vcmask 80896
  %v104 = vsel %vm102, %v27, 0
  %vm106 = vcmask 1044480
  %v108 = vsel %vm106, %v90, 0
  %v111 = vsel %vm106, %v91, 0
  %v114 = vsel %vm106, %v92, 0
  %v117 = vsel %vm106, %v93, 0
  %v120 = vsel %vm106, %v94, 0
  %v123 = vsel %vm106, %v95, 0
  %v126 = vsel %vm106, %v96, 0
  %v129 = vsel %vm106, %v97, 0
  %v132 = vsel %vm106, %v98, 0
  %v135 = vsel %vm106, %v99, 0
  %v138 = vsel %vm106, %v100, 0
  %v141 = vsel %vm106, %v101, 0
  %143 = vmatpush.bf16.msra.mxu0 0
  %144 = vmatpush.bf16.msra.mxu0 0
  %145 = vmatpush.bf16.msra.mxu0 0
  %146 = vmatpush.bf16.msra.mxu0 0
  %147 = vmatpush.bf16.msra.mxu0 0
  %148 = vmatpush.bf16.msra.mxu0 0
  %149 = vmatpush.bf16.msra.mxu0 0
  %150 = vmatpush.bf16.msra.mxu0 %v108
  %151 = vmatmul.bf16.gmra.mxu0 %v104
  %v152 = vpop.f32.mrf.mxu0
  %v153 = vadd.f32 0.0, %v152
  %v154 = vpop.f32.mrf.mxu0
  %155 = vdwg.mxu0
  %156 = vmatpush.bf16.msra.mxu0 0
  %157 = vmatpush.bf16.msra.mxu0 0
  %158 = vmatpush.bf16.msra.mxu0 0
  %159 = vmatpush.bf16.msra.mxu0 0
  %160 = vmatpush.bf16.msra.mxu0 0
  %161 = vmatpush.bf16.msra.mxu0 0
  %162 = vmatpush.bf16.msra.mxu0 0
  %163 = vmatpush.bf16.msra.mxu0 %v111
  %164 = vmatmul.bf16.gmra.mxu0 %v104
  %v165 = vpop.f32.mrf.mxu0
  %v166 = vadd.f32 0.0, %v165
  %v167 = vpop.f32.mrf.mxu0
  %168 = vdwg.mxu0
  %169 = vmatpush.bf16.msra.mxu0 0
  %170 = vmatpush.bf16.msra.mxu0 0
  %171 = vmatpush.bf16.msra.mxu0 0
  %172 = vmatpush.bf16.msra.mxu0 0
  %173 = vmatpush.bf16.msra.mxu0 0
  %174 = vmatpush.bf16.msra.mxu0 0
  %175 = vmatpush.bf16.msra.mxu0 0
  %176 = vmatpush.bf16.msra.mxu0 %v114
  %177 = vmatmul.bf16.gmra.mxu0 %v104
  %v178 = vpop.f32.mrf.mxu0
  %v179 = vadd.f32 0.0, %v178
  %v180 = vpop.f32.mrf.mxu0
  %181 = vdwg.mxu0
  %182 = vmatpush.bf16.msra.mxu0 0
  %183 = vmatpush.bf16.msra.mxu0 0
  %184 = vmatpush.bf16.msra.mxu0 0
  %185 = vmatpush.bf16.msra.mxu0 0
  %186 = vmatpush.bf16.msra.mxu0 0
  %187 = vmatpush.bf16.msra.mxu0 0
  %188 = vmatpush.bf16.msra.mxu0 0
  %189 = vmatpush.bf16.msra.mxu0 %v117
  %190 = vmatmul.bf16.gmra.mxu0 %v104
  %v191 = vpop.f32.mrf.mxu0
  %v192 = vadd.f32 0.0, %v191
  %v193 = vpop.f32.mrf.mxu0
  %194 = vdwg.mxu0
  %195 = vmatpush.bf16.msra.mxu0 0
  %196 = vmatpush.bf16.msra.mxu0 0
  %197 = vmatpush.bf16.msra.mxu0 0
  %198 = vmatpush.bf16.msra.mxu0 0
  %199 = vmatpush.bf16.msra.mxu0 0
  %200 = vmatpush.bf16.msra.mxu0 0
  %201 = vmatpush.bf16.msra.mxu0 0
  %202 = vmatpush.bf16.msra.mxu0 %v120
  %203 = vmatmul.bf16.gmra.mxu0 %v104
  %v204 = vpop.f32.mrf.mxu0
  %v205 = vadd.f32 0.0, %v204
  %v206 = vpop.f32.mrf.mxu0
  %207 = vdwg.mxu0
  %208 = vmatpush.bf16.msra.mxu0 0
  %209 = vmatpush.bf16.msra.mxu0 0
  %210 = vmatpush.bf16.msra.mxu0 0
  %211 = vmatpush.bf16.msra.mxu0 0
  %212 = vmatpush.bf16.msra.mxu0 0
  %213 = vmatpush.bf16.msra.mxu0 0
  %214 = vmatpush.bf16.msra.mxu0 0
  %215 = vmatpush.bf16.msra.mxu0 %v123
  %216 = vmatmul.bf16.gmra.mxu0 %v104
  %v217 = vpop.f32.mrf.mxu0
  %v218 = vadd.f32 0.0, %v217
  %v219 = vpop.f32.mrf.mxu0
  %220 = vdwg.mxu0
  %221 = vmatpush.bf16.msra.mxu0 0
  %222 = vmatpush.bf16.msra.mxu0 0
  %223 = vmatpush.bf16.msra.mxu0 0
  %224 = vmatpush.bf16.msra.mxu0 0
  %225 = vmatpush.bf16.msra.mxu0 0
  %226 = vmatpush.bf16.msra.mxu0 0
  %227 = vmatpush.bf16.msra.mxu0 0
  %228 = vmatpush.bf16.msra.mxu0 %v126
  %229 = vmatmul.bf16.gmra.mxu0 %v104
  %v230 = vpop.f32.mrf.mxu0
  %v231 = vadd.f32 0.0, %v230
  %v232 = vpop.f32.mrf.mxu0
  %233 = vdwg.mxu0
  %234 = vmatpush.bf16.msra.mxu0 0
  %235 = vmatpush.bf16.msra.mxu0 0
  %236 = vmatpush.bf16.msra.mxu0 0
  %237 = vmatpush.bf16.msra.mxu0 0
  %238 = vmatpush.bf16.msra.mxu0 0
  %239 = vmatpush.bf16.msra.mxu0 0
  %240 = vmatpush.bf16.msra.mxu0 0
  %241 = vmatpush.bf16.msra.mxu0 %v129
  %242 = vmatmul.bf16.gmra.mxu0 %v104
  %v243 = vpop.f32.mrf.mxu0
  %v244 = vadd.f32 0.0, %v243
  %v245 = vpop.f32.mrf.mxu0
  %246 = vdwg.mxu0
  %247 = vmatpush.bf16.msra.mxu0 0
  %248 = vmatpush.bf16.msra.mxu0 0
  %249 = vmatpush.bf16.msra.mxu0 0
  %250 = vmatpush.bf16.msra.mxu0 0
  %251 = vmatpush.bf16.msra.mxu0 0
  %252 = vmatpush.bf16.msra.mxu0 0
  %253 = vmatpush.bf16.msra.mxu0 0
  %254 = vmatpush.bf16.msra.mxu0 %v132
  %255 = vmatmul.bf16.gmra.mxu0 %v104
  %v256 = vpop.f32.mrf.mxu0
  %v257 = vadd.f32 0.0, %v256
  %v258 = vpop.f32.mrf.mxu0
  %259 = vdwg.mxu0
  %260 = vmatpush.bf16.msra.mxu0 0
  %261 = vmatpush.bf16.msra.mxu0 0
  %262 = vmatpush.bf16.msra.mxu0 0
  %263 = vmatpush.bf16.msra.mxu0 0
  %264 = vmatpush.bf16.msra.mxu0 0
  %265 = vmatpush.bf16.msra.mxu0 0
  %266 = vmatpush.bf16.msra.mxu0 0
  %267 = vmatpush.bf16.msra.mxu0 %v135
  %268 = vmatmul.bf16.gmra.mxu0 %v104
  %v269 = vpop.f32.mrf.mxu0
  %v270 = vadd.f32 0.0, %v269
  %v271 = vpop.f32.mrf.mxu0
  %272 = vdwg.mxu0
  %273 = vmatpush.bf16.msra.mxu0 0
  %274 = vmatpush.bf16.msra.mxu0 0
  %275 = vmatpush.bf16.msra.mxu0 0
  %276 = vmatpush.bf16.msra.mxu0 0
  %277 = vmatpush.bf16.msra.mxu0 0
  %278 = vmatpush.bf16.msra.mxu0 0
  %279 = vmatpush.bf16.msra.mxu0 0
  %280 = vmatpush.bf16.msra.mxu0 %v138
  %281 = vmatmul.bf16.gmra.mxu0 %v104
  %v282 = vpop.f32.mrf.mxu0
  %v283 = vadd.f32 0.0, %v282
  %v284 = vpop.f32.mrf.mxu0
  %285 = vdwg.mxu0
  %286 = vmatpush.bf16.msra.mxu0 0
  %287 = vmatpush.bf16.msra.mxu0 0
  %288 = vmatpush.bf16.msra.mxu0 0
  %289 = vmatpush.bf16.msra.mxu0 0
  %290 = vmatpush.bf16.msra.mxu0 0
  %291 = vmatpush.bf16.msra.mxu0 0
  %292 = vmatpush.bf16.msra.mxu0 0
  %293 = vmatpush.bf16.msra.mxu0 %v141
  %294 = vmatmul.bf16.gmra.mxu0 %v104
  %v295 = vpop.f32.mrf.mxu0
  %v296 = vadd.f32 0.0, %v295
  %v297 = vpop.f32.mrf.mxu0
  %298 = vdwg.mxu0
  %v301 = vperm.slane %v40, 0
  %v302 = vperm.slane %v40, 1
  %v303 = vperm.slane %v40, 2
  %v304 = vperm.slane %v40, 3
  %v305 = vperm.slane %v40, 4
  %v306 = vperm.slane %v40, 5
  %v307 = vperm.slane %v40, 6
  %v308 = vperm.slane %v40, 7
  %v309 = vperm.slane %v41, 0
  %v310 = vperm.slane %v41, 1
  %v311 = vperm.slane %v41, 2
  %v312 = vperm.slane %v41, 3
  %v325 = vadd.f32 %v301, %v153
  %v326 = vadd.f32 %v302, %v166
  %v327 = vadd.f32 %v303, %v179
  %v328 = vadd.f32 %v304, %v192
  %v329 = vadd.f32 %v305, %v205
  %v330 = vadd.f32 %v306, %v218
  %v331 = vadd.f32 %v307, %v231
  %v332 = vadd.f32 %v308, %v244
  %v333 = vadd.f32 %v309, %v257
  %v334 = vadd.f32 %v310, %v270
  %v335 = vadd.f32 %v311, %v283
  %v336 = vadd.f32 %v312, %v296
  %v337 = vld [vmem:[%s4] sm:$0xff]
  %v338 = vld [vmem:[%s4 + $0x8] sm:$0xff]
  %v339 = vld [vmem:[%s4 + $0x10] sm:$0xff]
  %v340 = vld [vmem:[%s4 + $0x18] sm:$0xff]
  %v341 = vld [vmem:[%s4 + $0x20] sm:$0xff]
  %v342 = vld [vmem:[%s4 + $0x28] sm:$0xff]
  %v343 = vld [vmem:[%s4 + $0x30] sm:$0xff]
  %v344 = vld [vmem:[%s4 + $0x38] sm:$0xff]
  %v345 = vld [vmem:[%s4 + $0x40] sm:$0xff]
  %v346 = vld [vmem:[%s4 + $0x48] sm:$0xff]
  %v347 = vld [vmem:[%s4 + $0x50] sm:$0xff]
  %v348 = vld [vmem:[%s4 + $0x58] sm:$0xff]
  %v349 = vld [vmem:[%s4 + $0x60] sm:$0xff]
  %v350 = vld [vmem:[%s4 + $0x68] sm:$0xff]
  %v351 = vld [vmem:[%s4 + $0x70] sm:$0xff]
  %v352 = vld [vmem:[%s4 + $0x78] sm:$0xff]
  %v353 = vld [vmem:[%s4 + $0x80] sm:$0xff]
  %v354 = vld [vmem:[%s4 + $0x88] sm:$0xff]
  %v355 = vld [vmem:[%s4 + $0x90] sm:$0xff]
  %v356 = vld [vmem:[%s4 + $0x98] sm:$0xff]
  %v357 = vld [vmem:[%s4 + $0xa0] sm:$0xff]
  %v358 = vld [vmem:[%s4 + $0xa8] sm:$0xff]
  %v359 = vld [vmem:[%s4 + $0xb0] sm:$0xff]
  %v360 = vld [vmem:[%s4 + $0xb8] sm:$0xff]
  %v361 = vld [vmem:[%s4 + $0xc0] sm:$0xff]
  %v362 = vld [vmem:[%s4 + $0xc8] sm:$0xff]
  %v363 = vld [vmem:[%s4 + $0xd0] sm:$0xff]
  %v364 = vld [vmem:[%s4 + $0xd8] sm:$0xff]
  %v365 = vld [vmem:[%s4 + $0xe0] sm:$0xff]
  %v366 = vld [vmem:[%s4 + $0xe8] sm:$0xff]
  %v367 = vld [vmem:[%s4 + $0xf0] sm:$0xff]
  %v368 = vld [vmem:[%s4 + $0xf8] sm:$0xff]
  %v369 = vld [vmem:[%s4 + $0x100] sm:$0xff]
  %v370 = vld [vmem:[%s4 + $0x108] sm:$0xff]
  %v371 = vld [vmem:[%s4 + $0x110] sm:$0xff]
  %v372 = vld [vmem:[%s4 + $0x118] sm:$0xff]
  %v373 = vld [vmem:[%s4 + $0x120] sm:$0xff]
  %v374 = vld [vmem:[%s4 + $0x128] sm:$0xff]
  %v375 = vld [vmem:[%s4 + $0x130] sm:$0xff]
  %v376 = vld [vmem:[%s4 + $0x138] sm:$0xff]
  %v377 = vld [vmem:[%s4 + $0x140] sm:$0xff]
  %v378 = vld [vmem:[%s4 + $0x148] sm:$0xff]
  %v379 = vld [vmem:[%s4 + $0x150] sm:$0xff]
  %v380 = vld [vmem:[%s4 + $0x158] sm:$0xff]
  %v381 = vld [vmem:[%s4 + $0x160] sm:$0xff]
  %v382 = vld [vmem:[%s4 + $0x168] sm:$0xff]
  %v383 = vld [vmem:[%s4 + $0x170] sm:$0xff]
  %v384 = vld [vmem:[%s4 + $0x178] sm:$0xff]
  %v385 = vld [vmem:[%s4 + $0x180] sm:$0xff]
  %v386 = vld [vmem:[%s4 + $0x188] sm:$0xff]
  %v387 = vld [vmem:[%s4 + $0x190] sm:$0xff]
  %v388 = vld [vmem:[%s4 + $0x198] sm:$0xff]
  %v389 = vld [vmem:[%s4 + $0x1a0] sm:$0xff]
  %v390 = vld [vmem:[%s4 + $0x1a8] sm:$0xff]
  %v391 = vld [vmem:[%s4 + $0x1b0] sm:$0xff]
  %v392 = vld [vmem:[%s4 + $0x1b8] sm:$0xff]
  %v393 = vld [vmem:[%s4 + $0x1c0] sm:$0xff]
  %v394 = vld [vmem:[%s4 + $0x1c8] sm:$0xff]
  %v395 = vld [vmem:[%s4 + $0x1d0] sm:$0xff]
  %v396 = vld [vmem:[%s4 + $0x1d8] sm:$0xff]
  %v397 = vld [vmem:[%s4 + $0x1e0] sm:$0xff]
  %v398 = vld [vmem:[%s4 + $0x1e8] sm:$0xff]
  %v399 = vld [vmem:[%s4 + $0x1f0] sm:$0xff]
  %v400 = vld [vmem:[%s4 + $0x1f8] sm:$0xff]
  %v401 = vld [vmem:[%s4 + $0x200] sm:$0xff]
  %v402 = vld [vmem:[%s4 + $0x208] sm:$0xff]
  %v403 = vld [vmem:[%s4 + $0x210] sm:$0xff]
  %v404 = vld [vmem:[%s4 + $0x218] sm:$0xff]
  %v405 = vld [vmem:[%s4 + $0x220] sm:$0xff]
  %v406 = vld [vmem:[%s4 + $0x228] sm:$0xff]
  %v407 = vld [vmem:[%s4 + $0x230] sm:$0xff]
  %v408 = vld [vmem:[%s4 + $0x238] sm:$0xff]
  %v409 = vld [vmem:[%s4 + $0x240] sm:$0xff]
  %v410 = vld [vmem:[%s4 + $0x248] sm:$0xff]
  %v411 = vld [vmem:[%s4 + $0x250] sm:$0xff]
  %v412 = vld [vmem:[%s4 + $0x258] sm:$0xff]
  %v413 = vld [vmem:[%s4 + $0x260] sm:$0xff]
  %v414 = vld [vmem:[%s4 + $0x268] sm:$0xff]
  %v415 = vld [vmem:[%s4 + $0x270] sm:$0xff]
  %v416 = vld [vmem:[%s4 + $0x278] sm:$0xff]
  %v417 = vld [vmem:[%s4 + $0x280] sm:$0xff]
  %v418 = vld [vmem:[%s4 + $0x288] sm:$0xff]
  %v419 = vld [vmem:[%s4 + $0x290] sm:$0xff]
  %v420 = vld [vmem:[%s4 + $0x298] sm:$0xff]
  %v421 = vld [vmem:[%s4 + $0x2a0] sm:$0xff]
  %v422 = vld [vmem:[%s4 + $0x2a8] sm:$0xff]
  %v423 = vld [vmem:[%s4 + $0x2b0] sm:$0xff]
  %v424 = vld [vmem:[%s4 + $0x2b8] sm:$0xff]
  %v425 = vld [vmem:[%s4 + $0x2c0] sm:$0xff]
  %v426 = vld [vmem:[%s4 + $0x2c8] sm:$0xff]
  %v427 = vld [vmem:[%s4 + $0x2d0] sm:$0xff]
  %v428 = vld [vmem:[%s4 + $0x2d8] sm:$0xff]
  %v429 = vld [vmem:[%s4 + $0x2e0] sm:$0xff]
  %v430 = vld [vmem:[%s4 + $0x2e8] sm:$0xff]
  %v431 = vld [vmem:[%s4 + $0x2f0] sm:$0xff]
  %v432 = vld [vmem:[%s4 + $0x2f8] sm:$0xff]
  %v433 = vld [vmem:[%s4 + $0x300] sm:$0xff]
  %v434 = vld [vmem:[%s4 + $0x308] sm:$0xff]
  %v435 = vld [vmem:[%s4 + $0x310] sm:$0xff]
  %v436 = vld [vmem:[%s4 + $0x318] sm:$0xff]
  %v437 = vld [vmem:[%s4 + $0x320] sm:$0xff]
  %v438 = vld [vmem:[%s4 + $0x328] sm:$0xff]
  %v439 = vld [vmem:[%s4 + $0x330] sm:$0xff]
  %v440 = vld [vmem:[%s4 + $0x338] sm:$0xff]
  %v441 = vld [vmem:[%s4 + $0x340] sm:$0xff]
  %v442 = vld [vmem:[%s4 + $0x348] sm:$0xff]
  %v443 = vld [vmem:[%s4 + $0x350] sm:$0xff]
  %v444 = vld [vmem:[%s4 + $0x358] sm:$0xff]
  %v445 = vld [vmem:[%s4 + $0x360] sm:$0xff]
  %v446 = vld [vmem:[%s4 + $0x368] sm:$0xff]
  %v447 = vld [vmem:[%s4 + $0x370] sm:$0xff]
  %v448 = vld [vmem:[%s4 + $0x378] sm:$0xff]
  %v449 = vld [vmem:[%s4 + $0x380] sm:$0xff]
  %v450 = vld [vmem:[%s4 + $0x388] sm:$0xff]
  %v451 = vld [vmem:[%s4 + $0x390] sm:$0xff]
  %v452 = vld [vmem:[%s4 + $0x398] sm:$0xff]
  %v453 = vld [vmem:[%s4 + $0x3a0] sm:$0xff]
  %v454 = vld [vmem:[%s4 + $0x3a8] sm:$0xff]
  %v455 = vld [vmem:[%s4 + $0x3b0] sm:$0xff]
  %v456 = vld [vmem:[%s4 + $0x3b8] sm:$0xff]
  %v457 = vld [vmem:[%s4 + $0x3c0] sm:$0xff]
  %v458 = vld [vmem:[%s4 + $0x3c8] sm:$0xff]
  %v459 = vld [vmem:[%s4 + $0x3d0] sm:$0xff]
  %v460 = vld [vmem:[%s4 + $0x3d8] sm:$0xff]
  %v461 = vld [vmem:[%s4 + $0x3e0] sm:$0xff]
  %v462 = vld [vmem:[%s4 + $0x3e8] sm:$0xff]
  %v463 = vld [vmem:[%s4 + $0x3f0] sm:$0xff]
  %v464 = vld [vmem:[%s4 + $0x3f8] sm:$0xff]
  %v465 = vld [vmem:[%s4 + $0x400] sm:$0xff]
  %v466 = vld [vmem:[%s4 + $0x408] sm:$0xff]
  %v467 = vld [vmem:[%s4 + $0x410] sm:$0xff]
  %v468 = vld [vmem:[%s4 + $0x418] sm:$0xff]
  %v469 = vld [vmem:[%s4 + $0x420] sm:$0xff]
  %v470 = vld [vmem:[%s4 + $0x428] sm:$0xff]
  %v471 = vld [vmem:[%s4 + $0x430] sm:$0xff]
  %v472 = vld [vmem:[%s4 + $0x438] sm:$0xff]
  %v473 = vld [vmem:[%s4 + $0x440] sm:$0xff]
  %v474 = vld [vmem:[%s4 + $0x448] sm:$0xff]
  %v475 = vld [vmem:[%s4 + $0x450] sm:$0xff]
  %v476 = vld [vmem:[%s4 + $0x458] sm:$0xff]
  %v477 = vld [vmem:[%s4 + $0x460] sm:$0xff]
  %v478 = vld [vmem:[%s4 + $0x468] sm:$0xff]
  %v479 = vld [vmem:[%s4 + $0x470] sm:$0xff]
  %v480 = vld [vmem:[%s4 + $0x478] sm:$0xff]
  %v481 = vld [vmem:[%s4 + $0x480] sm:$0xff]
  %v482 = vld [vmem:[%s4 + $0x488] sm:$0xff]
  %v483 = vld [vmem:[%s4 + $0x490] sm:$0xff]
  %v484 = vld [vmem:[%s4 + $0x498] sm:$0xff]
  %v485 = vld [vmem:[%s4 + $0x4a0] sm:$0xff]
  %v486 = vld [vmem:[%s4 + $0x4a8] sm:$0xff]
  %v487 = vld [vmem:[%s4 + $0x4b0] sm:$0xff]
  %v488 = vld [vmem:[%s4 + $0x4b8] sm:$0xff]
  %v489 = vld [vmem:[%s4 + $0x4c0] sm:$0xff]
  %v490 = vld [vmem:[%s4 + $0x4c8] sm:$0xff]
  %v491 = vld [vmem:[%s4 + $0x4d0] sm:$0xff]
  %v492 = vld [vmem:[%s4 + $0x4d8] sm:$0xff]
  %v493 = vld [vmem:[%s4 + $0x4e0] sm:$0xff]
  %v494 = vld [vmem:[%s4 + $0x4e8] sm:$0xff]
  %v495 = vld [vmem:[%s4 + $0x4f0] sm:$0xff]
  %v496 = vld [vmem:[%s4 + $0x4f8] sm:$0xff]
  %v497 = vld [vmem:[%s4 + $0x500] sm:$0xff]
  %v498 = vld [vmem:[%s4 + $0x508] sm:$0xff]
  %v499 = vld [vmem:[%s4 + $0x510] sm:$0xff]
  %v500 = vld [vmem:[%s4 + $0x518] sm:$0xff]
  %v501 = vld [vmem:[%s4 + $0x520] sm:$0xff]
  %v502 = vld [vmem:[%s4 + $0x528] sm:$0xff]
  %v503 = vld [vmem:[%s4 + $0x530] sm:$0xff]
  %v504 = vld [vmem:[%s4 + $0x538] sm:$0xff]
  %v505 = vld [vmem:[%s4 + $0x540] sm:$0xff]
  %v506 = vld [vmem:[%s4 + $0x548] sm:$0xff]
  %v507 = vld [vmem:[%s4 + $0x550] sm:$0xff]
  %v508 = vld [vmem:[%s4 + $0x558] sm:$0xff]
  %v509 = vld [vmem:[%s4 + $0x560] sm:$0xff]
  %v510 = vld [vmem:[%s4 + $0x568] sm:$0xff]
  %v511 = vld [vmem:[%s4 + $0x570] sm:$0xff]
  %v512 = vld [vmem:[%s4 + $0x578] sm:$0xff]
  %v513 = vld [vmem:[%s4 + $0x580] sm:$0xff]
  %v514 = vld [vmem:[%s4 + $0x588] sm:$0xff]
  %v515 = vld [vmem:[%s4 + $0x590] sm:$0xff]
  %v516 = vld [vmem:[%s4 + $0x598] sm:$0xff]
  %v517 = vld [vmem:[%s4 + $0x5a0] sm:$0xff]
  %v518 = vld [vmem:[%s4 + $0x5a8] sm:$0xff]
  %v519 = vld [vmem:[%s4 + $0x5b0] sm:$0xff]
  %v520 = vld [vmem:[%s4 + $0x5b8] sm:$0xff]
  %v521 = vld [vmem:[%s4 + $0x5c0] sm:$0xff]
  %v522 = vld [vmem:[%s4 + $0x5c8] sm:$0xff]
  %v523 = vld [vmem:[%s4 + $0x5d0] sm:$0xff]
  %v524 = vld [vmem:[%s4 + $0x5d8] sm:$0xff]
  %v525 = vld [vmem:[%s4 + $0x5e0] sm:$0xff]
  %v526 = vld [vmem:[%s4 + $0x5e8] sm:$0xff]
  %v527 = vld [vmem:[%s4 + $0x5f0] sm:$0xff]
  %v528 = vld [vmem:[%s4 + $0x5f8] sm:$0xff]
  %v529 = vld [vmem:[%s4 + $0x600] sm:$0xff]
  %v530 = vld [vmem:[%s4 + $0x608] sm:$0xff]
  %v531 = vld [vmem:[%s4 + $0x610] sm:$0xff]
  %v532 = vld [vmem:[%s4 + $0x618] sm:$0xff]
  %v533 = vld [vmem:[%s4 + $0x620] sm:$0xff]
  %v534 = vld [vmem:[%s4 + $0x628] sm:$0xff]
  %v535 = vld [vmem:[%s4 + $0x630] sm:$0xff]
  %v536 = vld [vmem:[%s4 + $0x638] sm:$0xff]
  %v537 = vld [vmem:[%s4 + $0x640] sm:$0xff]
  %v538 = vld [vmem:[%s4 + $0x648] sm:$0xff]
  %v539 = vld [vmem:[%s4 + $0x650] sm:$0xff]
  %v540 = vld [vmem:[%s4 + $0x658] sm:$0xff]
  %v541 = vld [vmem:[%s4 + $0x660] sm:$0xff]
  %v542 = vld [vmem:[%s4 + $0x668] sm:$0xff]
  %v543 = vld [vmem:[%s4 + $0x670] sm:$0xff]
  %v544 = vld [vmem:[%s4 + $0x678] sm:$0xff]
  %v545 = vld [vmem:[%s4 + $0x680] sm:$0xff]
  %v546 = vld [vmem:[%s4 + $0x688] sm:$0xff]
  %v547 = vld [vmem:[%s4 + $0x690] sm:$0xff]
  %v548 = vld [vmem:[%s4 + $0x698] sm:$0xff]
  %v549 = vld [vmem:[%s4 + $0x6a0] sm:$0xff]
  %v550 = vld [vmem:[%s4 + $0x6a8] sm:$0xff]
  %v551 = vld [vmem:[%s4 + $0x6b0] sm:$0xff]
  %v552 = vld [vmem:[%s4 + $0x6b8] sm:$0xff]
  %v769 = vunpack.c.l.b16 %v337
  %v770 = vunpack.c.h.b16 %v337
  %v771 = vunpack.c.l.b16 %v338
  %v772 = vunpack.c.h.b16 %v338
  %v773 = vunpack.c.l.b16 %v339
  %v774 = vunpack.c.h.b16 %v339
  %v775 = vunpack.c.l.b16 %v340
  %v776 = vunpack.c.h.b16 %v340
  %v777 = vunpack.c.l.b16 %v341
  %v778 = vunpack.c.h.b16 %v341
  %v779 = vunpack.c.l.b16 %v342
  %v780 = vunpack.c.h.b16 %v342
  %v781 = vunpack.c.l.b16 %v343
  %v782 = vunpack.c.h.b16 %v343
  %v783 = vunpack.c.l.b16 %v344
  %v784 = vunpack.c.h.b16 %v344
  %v785 = vunpack.c.l.b16 %v345
  %v786 = vunpack.c.h.b16 %v345
  %v787 = vunpack.c.l.b16 %v346
  %v788 = vunpack.c.h.b16 %v346
  %v789 = vunpack.c.l.b16 %v347
  %v790 = vunpack.c.h.b16 %v347
  %v791 = vunpack.c.l.b16 %v348
  %v792 = vunpack.c.h.b16 %v348
  %v793 = vunpack.c.l.b16 %v349
  %v794 = vunpack.c.h.b16 %v349
  %v795 = vunpack.c.l.b16 %v350
  %v796 = vunpack.c.h.b16 %v350
  %v797 = vunpack.c.l.b16 %v351
  %v798 = vunpack.c.h.b16 %v351
  %v799 = vunpack.c.l.b16 %v352
  %v800 = vunpack.c.h.b16 %v352
  %v801 = vunpack.c.l.b16 %v353
  %v802 = vunpack.c.h.b16 %v353
  %v803 = vunpack.c.l.b16 %v354
  %v804 = vunpack.c.h.b16 %v354
  %v805 = vunpack.c.l.b16 %v355
  %v806 = vunpack.c.h.b16 %v355
  %v807 = vunpack.c.l.b16 %v356
  %v808 = vunpack.c.h.b16 %v356
  %v809 = vunpack.c.l.b16 %v357
  %v810 = vunpack.c.h.b16 %v357
  %v811 = vunpack.c.l.b16 %v358
  %v812 = vunpack.c.h.b16 %v358
  %v813 = vunpack.c.l.b16 %v359
  %v814 = vunpack.c.h.b16 %v359
  %v815 = vunpack.c.l.b16 %v360
  %v816 = vunpack.c.h.b16 %v360
  %v817 = vunpack.c.l.b16 %v361
  %v818 = vunpack.c.h.b16 %v361
  %v819 = vunpack.c.l.b16 %v362
  %v820 = vunpack.c.h.b16 %v362
  %v821 = vunpack.c.l.b16 %v363
  %v822 = vunpack.c.h.b16 %v363
  %v823 = vunpack.c.l.b16 %v364
  %v824 = vunpack.c.h.b16 %v364
  %v825 = vunpack.c.l.b16 %v365
  %v826 = vunpack.c.h.b16 %v365
  %v827 = vunpack.c.l.b16 %v366
  %v828 = vunpack.c.h.b16 %v366
  %v829 = vunpack.c.l.b16 %v367
  %v830 = vunpack.c.h.b16 %v367
  %v831 = vunpack.c.l.b16 %v368
  %v832 = vunpack.c.h.b16 %v368
  %v833 = vunpack.c.l.b16 %v369
  %v834 = vunpack.c.h.b16 %v369
  %v835 = vunpack.c.l.b16 %v370
  %v836 = vunpack.c.h.b16 %v370
  %v837 = vunpack.c.l.b16 %v371
  %v838 = vunpack.c.h.b16 %v371
  %v839 = vunpack.c.l.b16 %v372
  %v840 = vunpack.c.h.b16 %v372
  %v841 = vunpack.c.l.b16 %v373
  %v842 = vunpack.c.h.b16 %v373
  %v843 = vunpack.c.l.b16 %v374
  %v844 = vunpack.c.h.b16 %v374
  %v845 = vunpack.c.l.b16 %v375
  %v846 = vunpack.c.h.b16 %v375
  %v847 = vunpack.c.l.b16 %v376
  %v848 = vunpack.c.h.b16 %v376
  %v849 = vunpack.c.l.b16 %v377
  %v850 = vunpack.c.h.b16 %v377
  %v851 = vunpack.c.l.b16 %v378
  %v852 = vunpack.c.h.b16 %v378
  %v853 = vunpack.c.l.b16 %v379
  %v854 = vunpack.c.h.b16 %v379
  %v855 = vunpack.c.l.b16 %v380
  %v856 = vunpack.c.h.b16 %v380
  %v857 = vunpack.c.l.b16 %v381
  %v858 = vunpack.c.h.b16 %v381
  %v859 = vunpack.c.l.b16 %v382
  %v860 = vunpack.c.h.b16 %v382
  %v861 = vunpack.c.l.b16 %v383
  %v862 = vunpack.c.h.b16 %v383
  %v863 = vunpack.c.l.b16 %v384
  %v864 = vunpack.c.h.b16 %v384
  %v865 = vunpack.c.l.b16 %v385
  %v866 = vunpack.c.h.b16 %v385
  %v867 = vunpack.c.l.b16 %v386
  %v868 = vunpack.c.h.b16 %v386
  %v869 = vunpack.c.l.b16 %v387
  %v870 = vunpack.c.h.b16 %v387
  %v871 = vunpack.c.l.b16 %v388
  %v872 = vunpack.c.h.b16 %v388
  %v873 = vunpack.c.l.b16 %v389
  %v874 = vunpack.c.h.b16 %v389
  %v875 = vunpack.c.l.b16 %v390
  %v876 = vunpack.c.h.b16 %v390
  %v877 = vunpack.c.l.b16 %v391
  %v878 = vunpack.c.h.b16 %v391
  %v879 = vunpack.c.l.b16 %v392
  %v880 = vunpack.c.h.b16 %v392
  %v881 = vunpack.c.l.b16 %v393
  %v882 = vunpack.c.h.b16 %v393
  %v883 = vunpack.c.l.b16 %v394
  %v884 = vunpack.c.h.b16 %v394
  %v885 = vunpack.c.l.b16 %v395
  %v886 = vunpack.c.h.b16 %v395
  %v887 = vunpack.c.l.b16 %v396
  %v888 = vunpack.c.h.b16 %v396
  %v889 = vunpack.c.l.b16 %v397
  %v890 = vunpack.c.h.b16 %v397
  %v891 = vunpack.c.l.b16 %v398
  %v892 = vunpack.c.h.b16 %v398
  %v893 = vunpack.c.l.b16 %v399
  %v894 = vunpack.c.h.b16 %v399
  %v895 = vunpack.c.l.b16 %v400
  %v896 = vunpack.c.h.b16 %v400
  %v897 = vunpack.c.l.b16 %v401
  %v898 = vunpack.c.h.b16 %v401
  %v899 = vunpack.c.l.b16 %v402
  %v900 = vunpack.c.h.b16 %v402
  %v901 = vunpack.c.l.b16 %v403
  %v902 = vunpack.c.h.b16 %v403
  %v903 = vunpack.c.l.b16 %v404
  %v904 = vunpack.c.h.b16 %v404
  %v905 = vunpack.c.l.b16 %v405
  %v906 = vunpack.c.h.b16 %v405
  %v907 = vunpack.c.l.b16 %v406
  %v908 = vunpack.c.h.b16 %v406
  %v909 = vunpack.c.l.b16 %v407
  %v910 = vunpack.c.h.b16 %v407
  %v911 = vunpack.c.l.b16 %v408
  %v912 = vunpack.c.h.b16 %v408
  %v913 = vunpack.c.l.b16 %v409
  %v914 = vunpack.c.h.b16 %v409
  %v915 = vunpack.c.l.b16 %v410
  %v916 = vunpack.c.h.b16 %v410
  %v917 = vunpack.c.l.b16 %v411
  %v918 = vunpack.c.h.b16 %v411
  %v919 = vunpack.c.l.b16 %v412
  %v920 = vunpack.c.h.b16 %v412
  %v921 = vunpack.c.l.b16 %v413
  %v922 = vunpack.c.h.b16 %v413
  %v923 = vunpack.c.l.b16 %v414
  %v924 = vunpack.c.h.b16 %v414
  %v925 = vunpack.c.l.b16 %v415
  %v926 = vunpack.c.h.b16 %v415
  %v927 = vunpack.c.l.b16 %v416
  %v928 = vunpack.c.h.b16 %v416
  %v929 = vunpack.c.l.b16 %v417
  %v930 = vunpack.c.h.b16 %v417
  %v931 = vunpack.c.l.b16 %v418
  %v932 = vunpack.c.h.b16 %v418
  %v933 = vunpack.c.l.b16 %v419
  %v934 = vunpack.c.h.b16 %v419
  %v935 = vunpack.c.l.b16 %v420
  %v936 = vunpack.c.h.b16 %v420
  %v937 = vunpack.c.l.b16 %v421
  %v938 = vunpack.c.h.b16 %v421
  %v939 = vunpack.c.l.b16 %v422
  %v940 = vunpack.c.h.b16 %v422
  %v941 = vunpack.c.l.b16 %v423
  %v942 = vunpack.c.h.b16 %v423
  %v943 = vunpack.c.l.b16 %v424
  %v944 = vunpack.c.h.b16 %v424
  %v945 = vunpack.c.l.b16 %v425
  %v946 = vunpack.c.h.b16 %v425
  %v947 = vunpack.c.l.b16 %v426
  %v948 = vunpack.c.h.b16 %v426
  %v949 = vunpack.c.l.b16 %v427
  %v950 = vunpack.c.h.b16 %v427
  %v951 = vunpack.c.l.b16 %v428
  %v952 = vunpack.c.h.b16 %v428
  %v953 = vunpack.c.l.b16 %v429
  %v954 = vunpack.c.h.b16 %v429
  %v955 = vunpack.c.l.b16 %v430
  %v956 = vunpack.c.h.b16 %v430
  %v957 = vunpack.c.l.b16 %v431
  %v958 = vunpack.c.h.b16 %v431
  %v959 = vunpack.c.l.b16 %v432
  %v960 = vunpack.c.h.b16 %v432
  %v961 = vunpack.c.l.b16 %v433
  %v962 = vunpack.c.h.b16 %v433
  %v963 = vunpack.c.l.b16 %v434
  %v964 = vunpack.c.h.b16 %v434
  %v965 = vunpack.c.l.b16 %v435
  %v966 = vunpack.c.h.b16 %v435
  %v967 = vunpack.c.l.b16 %v436
  %v968 = vunpack.c.h.b16 %v436
  %v969 = vunpack.c.l.b16 %v437
  %v970 = vunpack.c.h.b16 %v437
  %v971 = vunpack.c.l.b16 %v438
  %v972 = vunpack.c.h.b16 %v438
  %v973 = vunpack.c.l.b16 %v439
  %v974 = vunpack.c.h.b16 %v439
  %v975 = vunpack.c.l.b16 %v440
  %v976 = vunpack.c.h.b16 %v440
  %v977 = vunpack.c.l.b16 %v441
  %v978 = vunpack.c.h.b16 %v441
  %v979 = vunpack.c.l.b16 %v442
  %v980 = vunpack.c.h.b16 %v442
  %v981 = vunpack.c.l.b16 %v443
  %v982 = vunpack.c.h.b16 %v443
  %v983 = vunpack.c.l.b16 %v444
  %v984 = vunpack.c.h.b16 %v444
  %v985 = vunpack.c.l.b16 %v445
  %v986 = vunpack.c.h.b16 %v445
  %v987 = vunpack.c.l.b16 %v446
  %v988 = vunpack.c.h.b16 %v446
  %v989 = vunpack.c.l.b16 %v447
  %v990 = vunpack.c.h.b16 %v447
  %v991 = vunpack.c.l.b16 %v448
  %v992 = vunpack.c.h.b16 %v448
  %v993 = vunpack.c.l.b16 %v449
  %v994 = vunpack.c.h.b16 %v449
  %v995 = vunpack.c.l.b16 %v450
  %v996 = vunpack.c.h.b16 %v450
  %v997 = vunpack.c.l.b16 %v451
  %v998 = vunpack.c.h.b16 %v451
  %v999 = vunpack.c.l.b16 %v452
  %v1000 = vunpack.c.h.b16 %v452
  %v1001 = vunpack.c.l.b16 %v453
  %v1002 = vunpack.c.h.b16 %v453
  %v1003 = vunpack.c.l.b16 %v454
  %v1004 = vunpack.c.h.b16 %v454
  %v1005 = vunpack.c.l.b16 %v455
  %v1006 = vunpack.c.h.b16 %v455
  %v1007 = vunpack.c.l.b16 %v456
  %v1008 = vunpack.c.h.b16 %v456
  %v1009 = vunpack.c.l.b16 %v457
  %v1010 = vunpack.c.h.b16 %v457
  %v1011 = vunpack.c.l.b16 %v458
  %v1012 = vunpack.c.h.b16 %v458
  %v1013 = vunpack.c.l.b16 %v459
  %v1014 = vunpack.c.h.b16 %v459
  %v1015 = vunpack.c.l.b16 %v460
  %v1016 = vunpack.c.h.b16 %v460
  %v1017 = vunpack.c.l.b16 %v461
  %v1018 = vunpack.c.h.b16 %v461
  %v1019 = vunpack.c.l.b16 %v462
  %v1020 = vunpack.c.h.b16 %v462
  %v1021 = vunpack.c.l.b16 %v463
  %v1022 = vunpack.c.h.b16 %v463
  %v1023 = vunpack.c.l.b16 %v464
  %v1024 = vunpack.c.h.b16 %v464
  %v1025 = vunpack.c.l.b16 %v465
  %v1026 = vunpack.c.h.b16 %v465
  %v1027 = vunpack.c.l.b16 %v466
  %v1028 = vunpack.c.h.b16 %v466
  %v1029 = vunpack.c.l.b16 %v467
  %v1030 = vunpack.c.h.b16 %v467
  %v1031 = vunpack.c.l.b16 %v468
  %v1032 = vunpack.c.h.b16 %v468
  %v1033 = vunpack.c.l.b16 %v469
  %v1034 = vunpack.c.h.b16 %v469
  %v1035 = vunpack.c.l.b16 %v470
  %v1036 = vunpack.c.h.b16 %v470
  %v1037 = vunpack.c.l.b16 %v471
  %v1038 = vunpack.c.h.b16 %v471
  %v1039 = vunpack.c.l.b16 %v472
  %v1040 = vunpack.c.h.b16 %v472
  %v1041 = vunpack.c.l.b16 %v473
  %v1042 = vunpack.c.h.b16 %v473
  %v1043 = vunpack.c.l.b16 %v474
  %v1044 = vunpack.c.h.b16 %v474
  %v1045 = vunpack.c.l.b16 %v475
  %v1046 = vunpack.c.h.b16 %v475
  %v1047 = vunpack.c.l.b16 %v476
  %v1048 = vunpack.c.h.b16 %v476
  %v1049 = vunpack.c.l.b16 %v477
  %v1050 = vunpack.c.h.b16 %v477
  %v1051 = vunpack.c.l.b16 %v478
  %v1052 = vunpack.c.h.b16 %v478
  %v1053 = vunpack.c.l.b16 %v479
  %v1054 = vunpack.c.h.b16 %v479
  %v1055 = vunpack.c.l.b16 %v480
  %v1056 = vunpack.c.h.b16 %v480
  %v1057 = vunpack.c.l.b16 %v481
  %v1058 = vunpack.c.h.b16 %v481
  %v1059 = vunpack.c.l.b16 %v482
  %v1060 = vunpack.c.h.b16 %v482
  %v1061 = vunpack.c.l.b16 %v483
  %v1062 = vunpack.c.h.b16 %v483
  %v1063 = vunpack.c.l.b16 %v484
  %v1064 = vunpack.c.h.b16 %v484
  %v1065 = vunpack.c.l.b16 %v485
  %v1066 = vunpack.c.h.b16 %v485
  %v1067 = vunpack.c.l.b16 %v486
  %v1068 = vunpack.c.h.b16 %v486
  %v1069 = vunpack.c.l.b16 %v487
  %v1070 = vunpack.c.h.b16 %v487
  %v1071 = vunpack.c.l.b16 %v488
  %v1072 = vunpack.c.h.b16 %v488
  %v1073 = vunpack.c.l.b16 %v489
  %v1074 = vunpack.c.h.b16 %v489
  %v1075 = vunpack.c.l.b16 %v490
  %v1076 = vunpack.c.h.b16 %v490
  %v1077 = vunpack.c.l.b16 %v491
  %v1078 = vunpack.c.h.b16 %v491
  %v1079 = vunpack.c.l.b16 %v492
  %v1080 = vunpack.c.h.b16 %v492
  %v1081 = vunpack.c.l.b16 %v493
  %v1082 = vunpack.c.h.b16 %v493
  %v1083 = vunpack.c.l.b16 %v494
  %v1084 = vunpack.c.h.b16 %v494
  %v1085 = vunpack.c.l.b16 %v495
  %v1086 = vunpack.c.h.b16 %v495
  %v1087 = vunpack.c.l.b16 %v496
  %v1088 = vunpack.c.h.b16 %v496
  %v1089 = vunpack.c.l.b16 %v497
  %v1090 = vunpack.c.h.b16 %v497
  %v1091 = vunpack.c.l.b16 %v498
  %v1092 = vunpack.c.h.b16 %v498
  %v1093 = vunpack.c.l.b16 %v499
  %v1094 = vunpack.c.h.b16 %v499
  %v1095 = vunpack.c.l.b16 %v500
  %v1096 = vunpack.c.h.b16 %v500
  %v1097 = vunpack.c.l.b16 %v501
  %v1098 = vunpack.c.h.b16 %v501
  %v1099 = vunpack.c.l.b16 %v502
  %v1100 = vunpack.c.h.b16 %v502
  %v1101 = vunpack.c.l.b16 %v503
  %v1102 = vunpack.c.h.b16 %v503
  %v1103 = vunpack.c.l.b16 %v504
  %v1104 = vunpack.c.h.b16 %v504
  %v1105 = vunpack.c.l.b16 %v505
  %v1106 = vunpack.c.h.b16 %v505
  %v1107 = vunpack.c.l.b16 %v506
  %v1108 = vunpack.c.h.b16 %v506
  %v1109 = vunpack.c.l.b16 %v507
  %v1110 = vunpack.c.h.b16 %v507
  %v1111 = vunpack.c.l.b16 %v508
  %v1112 = vunpack.c.h.b16 %v508
  %v1113 = vunpack.c.l.b16 %v509
  %v1114 = vunpack.c.h.b16 %v509
  %v1115 = vunpack.c.l.b16 %v510
  %v1116 = vunpack.c.h.b16 %v510
  %v1117 = vunpack.c.l.b16 %v511
  %v1118 = vunpack.c.h.b16 %v511
  %v1119 = vunpack.c.l.b16 %v512
  %v1120 = vunpack.c.h.b16 %v512
  %v1121 = vunpack.c.l.b16 %v513
  %v1122 = vunpack.c.h.b16 %v513
  %v1123 = vunpack.c.l.b16 %v514
  %v1124 = vunpack.c.h.b16 %v514
  %v1125 = vunpack.c.l.b16 %v515
  %v1126 = vunpack.c.h.b16 %v515
  %v1127 = vunpack.c.l.b16 %v516
  %v1128 = vunpack.c.h.b16 %v516
  %v1129 = vunpack.c.l.b16 %v517
  %v1130 = vunpack.c.h.b16 %v517
  %v1131 = vunpack.c.l.b16 %v518
  %v1132 = vunpack.c.h.b16 %v518
  %v1133 = vunpack.c.l.b16 %v519
  %v1134 = vunpack.c.h.b16 %v519
  %v1135 = vunpack.c.l.b16 %v520
  %v1136 = vunpack.c.h.b16 %v520
  %v1137 = vunpack.c.l.b16 %v521
  %v1138 = vunpack.c.h.b16 %v521
  %v1139 = vunpack.c.l.b16 %v522
  %v1140 = vunpack.c.h.b16 %v522
  %v1141 = vunpack.c.l.b16 %v523
  %v1142 = vunpack.c.h.b16 %v523
  %v1143 = vunpack.c.l.b16 %v524
  %v1144 = vunpack.c.h.b16 %v524
  %v1145 = vunpack.c.l.b16 %v525
  %v1146 = vunpack.c.h.b16 %v525
  %v1147 = vunpack.c.l.b16 %v526
  %v1148 = vunpack.c.h.b16 %v526
  %v1149 = vunpack.c.l.b16 %v527
  %v1150 = vunpack.c.h.b16 %v527
  %v1151 = vunpack.c.l.b16 %v528
  %v1152 = vunpack.c.h.b16 %v528
  %v1153 = vunpack.c.l.b16 %v529
  %v1154 = vunpack.c.h.b16 %v529
  %v1155 = vunpack.c.l.b16 %v530
  %v1156 = vunpack.c.h.b16 %v530
  %v1157 = vunpack.c.l.b16 %v531
  %v1158 = vunpack.c.h.b16 %v531
  %v1159 = vunpack.c.l.b16 %v532
  %v1160 = vunpack.c.h.b16 %v532
  %v1161 = vunpack.c.l.b16 %v533
  %v1162 = vunpack.c.h.b16 %v533
  %v1163 = vunpack.c.l.b16 %v534
  %v1164 = vunpack.c.h.b16 %v534
  %v1165 = vunpack.c.l.b16 %v535
  %v1166 = vunpack.c.h.b16 %v535
  %v1167 = vunpack.c.l.b16 %v536
  %v1168 = vunpack.c.h.b16 %v536
  %v1169 = vunpack.c.l.b16 %v537
  %v1170 = vunpack.c.h.b16 %v537
  %v1171 = vunpack.c.l.b16 %v538
  %v1172 = vunpack.c.h.b16 %v538
  %v1173 = vunpack.c.l.b16 %v539
  %v1174 = vunpack.c.h.b16 %v539
  %v1175 = vunpack.c.l.b16 %v540
  %v1176 = vunpack.c.h.b16 %v540
  %v1177 = vunpack.c.l.b16 %v541
  %v1178 = vunpack.c.h.b16 %v541
  %v1179 = vunpack.c.l.b16 %v542
  %v1180 = vunpack.c.h.b16 %v542
  %v1181 = vunpack.c.l.b16 %v543
  %v1182 = vunpack.c.h.b16 %v543
  %v1183 = vunpack.c.l.b16 %v544
  %v1184 = vunpack.c.h.b16 %v544
  %v1185 = vunpack.c.l.b16 %v545
  %v1186 = vunpack.c.h.b16 %v545
  %v1187 = vunpack.c.l.b16 %v546
  %v1188 = vunpack.c.h.b16 %v546
  %v1189 = vunpack.c.l.b16 %v547
  %v1190 = vunpack.c.h.b16 %v547
  %v1191 = vunpack.c.l.b16 %v548
  %v1192 = vunpack.c.h.b16 %v548
  %v1193 = vunpack.c.l.b16 %v549
  %v1194 = vunpack.c.h.b16 %v549
  %v1195 = vunpack.c.l.b16 %v550
  %v1196 = vunpack.c.h.b16 %v550
  %v1197 = vunpack.c.l.b16 %v551
  %v1198 = vunpack.c.h.b16 %v551
  %v1199 = vunpack.c.l.b16 %v552
  %v1200 = vunpack.c.h.b16 %v552
  %v1201 = vpack.c.b16 %v781, %v769
  %v1202 = vpack.c.b16 %v782, %v770
  %v1203 = vpack.c.b16 %v783, %v771
  %v1204 = vpack.c.b16 %v784, %v772
  %v1205 = vpack.c.b16 %v785, %v773
  %v1206 = vpack.c.b16 %v786, %v774
  %v1207 = vpack.c.b16 %v787, %v775
  %v1208 = vpack.c.b16 %v788, %v776
  %v1209 = vpack.c.b16 %v789, %v777
  %v1210 = vpack.c.b16 %v790, %v778
  %v1211 = vpack.c.b16 %v791, %v779
  %v1212 = vpack.c.b16 %v792, %v780
  %v1213 = vpack.c.b16 %v805, %v793
  %v1214 = vpack.c.b16 %v806, %v794
  %v1215 = vpack.c.b16 %v807, %v795
  %v1216 = vpack.c.b16 %v808, %v796
  %v1217 = vpack.c.b16 %v809, %v797
  %v1218 = vpack.c.b16 %v810, %v798
  %v1219 = vpack.c.b16 %v811, %v799
  %v1220 = vpack.c.b16 %v812, %v800
  %v1221 = vpack.c.b16 %v813, %v801
  %v1222 = vpack.c.b16 %v814, %v802
  %v1223 = vpack.c.b16 %v815, %v803
  %v1224 = vpack.c.b16 %v816, %v804
  %v1225 = vpack.c.b16 %v829, %v817
  %v1226 = vpack.c.b16 %v830, %v818
  %v1227 = vpack.c.b16 %v831, %v819
  %v1228 = vpack.c.b16 %v832, %v820
  %v1229 = vpack.c.b16 %v833, %v821
  %v1230 = vpack.c.b16 %v834, %v822
  %v1231 = vpack.c.b16 %v835, %v823
  %v1232 = vpack.c.b16 %v836, %v824
  %v1233 = vpack.c.b16 %v837, %v825
  %v1234 = vpack.c.b16 %v838, %v826
  %v1235 = vpack.c.b16 %v839, %v827
  %v1236 = vpack.c.b16 %v840, %v828
  %v1237 = vpack.c.b16 %v853, %v841
  %v1238 = vpack.c.b16 %v854, %v842
  %v1239 = vpack.c.b16 %v855, %v843
  %v1240 = vpack.c.b16 %v856, %v844
  %v1241 = vpack.c.b16 %v857, %v845
  %v1242 = vpack.c.b16 %v858, %v846
  %v1243 = vpack.c.b16 %v859, %v847
  %v1244 = vpack.c.b16 %v860, %v848
  %v1245 = vpack.c.b16 %v861, %v849
  %v1246 = vpack.c.b16 %v862, %v850
  %v1247 = vpack.c.b16 %v863, %v851
  %v1248 = vpack.c.b16 %v864, %v852
  %v1249 = vpack.c.b16 %v877, %v865
  %v1250 = vpack.c.b16 %v878, %v866
  %v1251 = vpack.c.b16 %v879, %v867
  %v1252 = vpack.c.b16 %v880, %v868
  %v1253 = vpack.c.b16 %v881, %v869
  %v1254 = vpack.c.b16 %v882, %v870
  %v1255 = vpack.c.b16 %v883, %v871
  %v1256 = vpack.c.b16 %v884, %v872
  %v1257 = vpack.c.b16 %v885, %v873
  %v1258 = vpack.c.b16 %v886, %v874
  %v1259 = vpack.c.b16 %v887, %v875
  %v1260 = vpack.c.b16 %v888, %v876
  %v1261 = vpack.c.b16 %v901, %v889
  %v1262 = vpack.c.b16 %v902, %v890
  %v1263 = vpack.c.b16 %v903, %v891
  %v1264 = vpack.c.b16 %v904, %v892
  %v1265 = vpack.c.b16 %v905, %v893
  %v1266 = vpack.c.b16 %v906, %v894
  %v1267 = vpack.c.b16 %v907, %v895
  %v1268 = vpack.c.b16 %v908, %v896
  %v1269 = vpack.c.b16 %v909, %v897
  %v1270 = vpack.c.b16 %v910, %v898
  %v1271 = vpack.c.b16 %v911, %v899
  %v1272 = vpack.c.b16 %v912, %v900
  %v1273 = vpack.c.b16 %v925, %v913
  %v1274 = vpack.c.b16 %v926, %v914
  %v1275 = vpack.c.b16 %v927, %v915
  %v1276 = vpack.c.b16 %v928, %v916
  %v1277 = vpack.c.b16 %v929, %v917
  %v1278 = vpack.c.b16 %v930, %v918
  %v1279 = vpack.c.b16 %v931, %v919
  %v1280 = vpack.c.b16 %v932, %v920
  %v1281 = vpack.c.b16 %v933, %v921
  %v1282 = vpack.c.b16 %v934, %v922
  %v1283 = vpack.c.b16 %v935, %v923
  %v1284 = vpack.c.b16 %v936, %v924
  %v1285 = vpack.c.b16 %v949, %v937
  %v1286 = vpack.c.b16 %v950, %v938
  %v1287 = vpack.c.b16 %v951, %v939
  %v1288 = vpack.c.b16 %v952, %v940
  %v1289 = vpack.c.b16 %v953, %v941
  %v1290 = vpack.c.b16 %v954, %v942
  %v1291 = vpack.c.b16 %v955, %v943
  %v1292 = vpack.c.b16 %v956, %v944
  %v1293 = vpack.c.b16 %v957, %v945
  %v1294 = vpack.c.b16 %v958, %v946
  %v1295 = vpack.c.b16 %v959, %v947
  %v1296 = vpack.c.b16 %v960, %v948
  %v1297 = vpack.c.b16 %v973, %v961
  %v1298 = vpack.c.b16 %v974, %v962
  %v1299 = vpack.c.b16 %v975, %v963
  %v1300 = vpack.c.b16 %v976, %v964
  %v1301 = vpack.c.b16 %v977, %v965
  %v1302 = vpack.c.b16 %v978, %v966
  %v1303 = vpack.c.b16 %v979, %v967
  %v1304 = vpack.c.b16 %v980, %v968
  %v1305 = vpack.c.b16 %v981, %v969
  %v1306 = vpack.c.b16 %v982, %v970
  %v1307 = vpack.c.b16 %v983, %v971
  %v1308 = vpack.c.b16 %v984, %v972
  %v1309 = vpack.c.b16 %v997, %v985
  %v1310 = vpack.c.b16 %v998, %v986
  %v1311 = vpack.c.b16 %v999, %v987
  %v1312 = vpack.c.b16 %v1000, %v988
  %v1313 = vpack.c.b16 %v1001, %v989
  %v1314 = vpack.c.b16 %v1002, %v990
  %v1315 = vpack.c.b16 %v1003, %v991
  %v1316 = vpack.c.b16 %v1004, %v992
  %v1317 = vpack.c.b16 %v1005, %v993
  %v1318 = vpack.c.b16 %v1006, %v994
  %v1319 = vpack.c.b16 %v1007, %v995
  %v1320 = vpack.c.b16 %v1008, %v996
  %v1321 = vpack.c.b16 %v1021, %v1009
  %v1322 = vpack.c.b16 %v1022, %v1010
  %v1323 = vpack.c.b16 %v1023, %v1011
  %v1324 = vpack.c.b16 %v1024, %v1012
  %v1325 = vpack.c.b16 %v1025, %v1013
  %v1326 = vpack.c.b16 %v1026, %v1014
  %v1327 = vpack.c.b16 %v1027, %v1015
  %v1328 = vpack.c.b16 %v1028, %v1016
  %v1329 = vpack.c.b16 %v1029, %v1017
  %v1330 = vpack.c.b16 %v1030, %v1018
  %v1331 = vpack.c.b16 %v1031, %v1019
  %v1332 = vpack.c.b16 %v1032, %v1020
  %v1333 = vpack.c.b16 %v1045, %v1033
  %v1334 = vpack.c.b16 %v1046, %v1034
  %v1335 = vpack.c.b16 %v1047, %v1035
  %v1336 = vpack.c.b16 %v1048, %v1036
  %v1337 = vpack.c.b16 %v1049, %v1037
  %v1338 = vpack.c.b16 %v1050, %v1038
  %v1339 = vpack.c.b16 %v1051, %v1039
  %v1340 = vpack.c.b16 %v1052, %v1040
  %v1341 = vpack.c.b16 %v1053, %v1041
  %v1342 = vpack.c.b16 %v1054, %v1042
  %v1343 = vpack.c.b16 %v1055, %v1043
  %v1344 = vpack.c.b16 %v1056, %v1044
  %v1345 = vpack.c.b16 %v1069, %v1057
  %v1346 = vpack.c.b16 %v1070, %v1058
  %v1347 = vpack.c.b16 %v1071, %v1059
  %v1348 = vpack.c.b16 %v1072, %v1060
  %v1349 = vpack.c.b16 %v1073, %v1061
  %v1350 = vpack.c.b16 %v1074, %v1062
  %v1351 = vpack.c.b16 %v1075, %v1063
  %v1352 = vpack.c.b16 %v1076, %v1064
  %v1353 = vpack.c.b16 %v1077, %v1065
  %v1354 = vpack.c.b16 %v1078, %v1066
  %v1355 = vpack.c.b16 %v1079, %v1067
  %v1356 = vpack.c.b16 %v1080, %v1068
  %v1357 = vpack.c.b16 %v1093, %v1081
  %v1358 = vpack.c.b16 %v1094, %v1082
  %v1359 = vpack.c.b16 %v1095, %v1083
  %v1360 = vpack.c.b16 %v1096, %v1084
  %v1361 = vpack.c.b16 %v1097, %v1085
  %v1362 = vpack.c.b16 %v1098, %v1086
  %v1363 = vpack.c.b16 %v1099, %v1087
  %v1364 = vpack.c.b16 %v1100, %v1088
  %v1365 = vpack.c.b16 %v1101, %v1089
  %v1366 = vpack.c.b16 %v1102, %v1090
  %v1367 = vpack.c.b16 %v1103, %v1091
  %v1368 = vpack.c.b16 %v1104, %v1092
  %v1369 = vpack.c.b16 %v1117, %v1105
  %v1370 = vpack.c.b16 %v1118, %v1106
  %v1371 = vpack.c.b16 %v1119, %v1107
  %v1372 = vpack.c.b16 %v1120, %v1108
  %v1373 = vpack.c.b16 %v1121, %v1109
  %v1374 = vpack.c.b16 %v1122, %v1110
  %v1375 = vpack.c.b16 %v1123, %v1111
  %v1376 = vpack.c.b16 %v1124, %v1112
  %v1377 = vpack.c.b16 %v1125, %v1113
  %v1378 = vpack.c.b16 %v1126, %v1114
  %v1379 = vpack.c.b16 %v1127, %v1115
  %v1380 = vpack.c.b16 %v1128, %v1116
  %v1381 = vpack.c.b16 %v1141, %v1129
  %v1382 = vpack.c.b16 %v1142, %v1130
  %v1383 = vpack.c.b16 %v1143, %v1131
  %v1384 = vpack.c.b16 %v1144, %v1132
  %v1385 = vpack.c.b16 %v1145, %v1133
  %v1386 = vpack.c.b16 %v1146, %v1134
  %v1387 = vpack.c.b16 %v1147, %v1135
  %v1388 = vpack.c.b16 %v1148, %v1136
  %v1389 = vpack.c.b16 %v1149, %v1137
  %v1390 = vpack.c.b16 %v1150, %v1138
  %v1391 = vpack.c.b16 %v1151, %v1139
  %v1392 = vpack.c.b16 %v1152, %v1140
  %v1393 = vpack.c.b16 %v1165, %v1153
  %v1394 = vpack.c.b16 %v1166, %v1154
  %v1395 = vpack.c.b16 %v1167, %v1155
  %v1396 = vpack.c.b16 %v1168, %v1156
  %v1397 = vpack.c.b16 %v1169, %v1157
  %v1398 = vpack.c.b16 %v1170, %v1158
  %v1399 = vpack.c.b16 %v1171, %v1159
  %v1400 = vpack.c.b16 %v1172, %v1160
  %v1401 = vpack.c.b16 %v1173, %v1161
  %v1402 = vpack.c.b16 %v1174, %v1162
  %v1403 = vpack.c.b16 %v1175, %v1163
  %v1404 = vpack.c.b16 %v1176, %v1164
  %v1405 = vpack.c.b16 %v1189, %v1177
  %v1406 = vpack.c.b16 %v1190, %v1178
  %v1407 = vpack.c.b16 %v1191, %v1179
  %v1408 = vpack.c.b16 %v1192, %v1180
  %v1409 = vpack.c.b16 %v1193, %v1181
  %v1410 = vpack.c.b16 %v1194, %v1182
  %v1411 = vpack.c.b16 %v1195, %v1183
  %v1412 = vpack.c.b16 %v1196, %v1184
  %v1413 = vpack.c.b16 %v1197, %v1185
  %v1414 = vpack.c.b16 %v1198, %v1186
  %v1415 = vpack.c.b16 %v1199, %v1187
  %v1416 = vpack.c.b16 %v1200, %v1188
  %vm1633 = vcmask 261120
  %v1635 = vsel %vm1633, %v39, 0
  %1637 = vmatpush.bf16.msra.mxu0 %v1285
  %1638 = vmatpush.bf16.msra.mxu0 %v1273
  %1639 = vmatpush.bf16.msra.mxu0 %v1261
  %1640 = vmatpush.bf16.msra.mxu0 %v1249
  %1641 = vmatpush.bf16.msra.mxu0 %v1237
  %1642 = vmatpush.bf16.msra.mxu0 %v1225
  %1643 = vmatpush.bf16.msra.mxu0 %v1213
  %1644 = vmatpush.bf16.msra.mxu0 %v1201
  %1645 = vmatmul.bf16.gmra.mxu0 %v37
  %v1646 = vpop.f32.mrf.mxu0
  %v1647 = vadd.f32 0.0, %v1646
  %v1648 = vpop.f32.mrf.mxu0
  %1649 = vdwg.mxu0
  %1650 = vmatpush.bf16.msra.mxu0 %v1381
  %1651 = vmatpush.bf16.msra.mxu0 %v1369
  %1652 = vmatpush.bf16.msra.mxu0 %v1357
  %1653 = vmatpush.bf16.msra.mxu0 %v1345
  %1654 = vmatpush.bf16.msra.mxu0 %v1333
  %1655 = vmatpush.bf16.msra.mxu0 %v1321
  %1656 = vmatpush.bf16.msra.mxu0 %v1309
  %1657 = vmatpush.bf16.msra.mxu0 %v1297
  %1658 = vmatmul.bf16.gmra.mxu0 %v38
  %v1659 = vpop.f32.mrf.mxu0
  %v1660 = vadd.f32 %v1647, %v1659
  %v1661 = vpop.f32.mrf.mxu0
  %1662 = vdwg.mxu0
  %1663 = vmatpush.bf16.msra.mxu0 0
  %1664 = vmatpush.bf16.msra.mxu0 0
  %1665 = vmatpush.bf16.msra.mxu0 0
  %1666 = vmatpush.bf16.msra.mxu0 0
  %1667 = vmatpush.bf16.msra.mxu0 0
  %1668 = vmatpush.bf16.msra.mxu0 0
  %1669 = vmatpush.bf16.msra.mxu0 %v1405
  %1670 = vmatpush.bf16.msra.mxu0 %v1393
  %1671 = vmatmul.bf16.gmra.mxu0 %v1635
  %v1672 = vpop.f32.mrf.mxu0
  %v1673 = vadd.f32 %v1660, %v1672
  %v1674 = vpop.f32.mrf.mxu0
  %1675 = vdwg.mxu0
  %1676 = vmatpush.bf16.msra.mxu0 %v1286
  %1677 = vmatpush.bf16.msra.mxu0 %v1274
  %1678 = vmatpush.bf16.msra.mxu0 %v1262
  %1679 = vmatpush.bf16.msra.mxu0 %v1250
  %1680 = vmatpush.bf16.msra.mxu0 %v1238
  %1681 = vmatpush.bf16.msra.mxu0 %v1226
  %1682 = vmatpush.bf16.msra.mxu0 %v1214
  %1683 = vmatpush.bf16.msra.mxu0 %v1202
  %1684 = vmatmul.bf16.gmra.mxu0 %v37
  %v1685 = vpop.f32.mrf.mxu0
  %v1686 = vadd.f32 0.0, %v1685
  %v1687 = vpop.f32.mrf.mxu0
  %1688 = vdwg.mxu0
  %1689 = vmatpush.bf16.msra.mxu0 %v1382
  %1690 = vmatpush.bf16.msra.mxu0 %v1370
  %1691 = vmatpush.bf16.msra.mxu0 %v1358
  %1692 = vmatpush.bf16.msra.mxu0 %v1346
  %1693 = vmatpush.bf16.msra.mxu0 %v1334
  %1694 = vmatpush.bf16.msra.mxu0 %v1322
  %1695 = vmatpush.bf16.msra.mxu0 %v1310
  %1696 = vmatpush.bf16.msra.mxu0 %v1298
  %1697 = vmatmul.bf16.gmra.mxu0 %v38
  %v1698 = vpop.f32.mrf.mxu0
  %v1699 = vadd.f32 %v1686, %v1698
  %v1700 = vpop.f32.mrf.mxu0
  %1701 = vdwg.mxu0
  %1702 = vmatpush.bf16.msra.mxu0 0
  %1703 = vmatpush.bf16.msra.mxu0 0
  %1704 = vmatpush.bf16.msra.mxu0 0
  %1705 = vmatpush.bf16.msra.mxu0 0
  %1706 = vmatpush.bf16.msra.mxu0 0
  %1707 = vmatpush.bf16.msra.mxu0 0
  %1708 = vmatpush.bf16.msra.mxu0 %v1406
  %1709 = vmatpush.bf16.msra.mxu0 %v1394
  %1710 = vmatmul.bf16.gmra.mxu0 %v1635
  %v1711 = vpop.f32.mrf.mxu0
  %v1712 = vadd.f32 %v1699, %v1711
  %v1713 = vpop.f32.mrf.mxu0
  %1714 = vdwg.mxu0
  %1715 = vmatpush.bf16.msra.mxu0 %v1287
  %1716 = vmatpush.bf16.msra.mxu0 %v1275
  %1717 = vmatpush.bf16.msra.mxu0 %v1263
  %1718 = vmatpush.bf16.msra.mxu0 %v1251
  %1719 = vmatpush.bf16.msra.mxu0 %v1239
  %1720 = vmatpush.bf16.msra.mxu0 %v1227
  %1721 = vmatpush.bf16.msra.mxu0 %v1215
  %1722 = vmatpush.bf16.msra.mxu0 %v1203
  %1723 = vmatmul.bf16.gmra.mxu0 %v37
  %v1724 = vpop.f32.mrf.mxu0
  %v1725 = vadd.f32 0.0, %v1724
  %v1726 = vpop.f32.mrf.mxu0
  %1727 = vdwg.mxu0
  %1728 = vmatpush.bf16.msra.mxu0 %v1383
  %1729 = vmatpush.bf16.msra.mxu0 %v1371
  %1730 = vmatpush.bf16.msra.mxu0 %v1359
  %1731 = vmatpush.bf16.msra.mxu0 %v1347
  %1732 = vmatpush.bf16.msra.mxu0 %v1335
  %1733 = vmatpush.bf16.msra.mxu0 %v1323
  %1734 = vmatpush.bf16.msra.mxu0 %v1311
  %1735 = vmatpush.bf16.msra.mxu0 %v1299
  %1736 = vmatmul.bf16.gmra.mxu0 %v38
  %v1737 = vpop.f32.mrf.mxu0
  %v1738 = vadd.f32 %v1725, %v1737
  %v1739 = vpop.f32.mrf.mxu0
  %1740 = vdwg.mxu0
  %1741 = vmatpush.bf16.msra.mxu0 0
  %1742 = vmatpush.bf16.msra.mxu0 0
  %1743 = vmatpush.bf16.msra.mxu0 0
  %1744 = vmatpush.bf16.msra.mxu0 0
  %1745 = vmatpush.bf16.msra.mxu0 0
  %1746 = vmatpush.bf16.msra.mxu0 0
  %1747 = vmatpush.bf16.msra.mxu0 %v1407
  %1748 = vmatpush.bf16.msra.mxu0 %v1395
  %1749 = vmatmul.bf16.gmra.mxu0 %v1635
  %v1750 = vpop.f32.mrf.mxu0
  %v1751 = vadd.f32 %v1738, %v1750
  %v1752 = vpop.f32.mrf.mxu0
  %1753 = vdwg.mxu0
  %1754 = vmatpush.bf16.msra.mxu0 %v1288
  %1755 = vmatpush.bf16.msra.mxu0 %v1276
  %1756 = vmatpush.bf16.msra.mxu0 %v1264
  %1757 = vmatpush.bf16.msra.mxu0 %v1252
  %1758 = vmatpush.bf16.msra.mxu0 %v1240
  %1759 = vmatpush.bf16.msra.mxu0 %v1228
  %1760 = vmatpush.bf16.msra.mxu0 %v1216
  %1761 = vmatpush.bf16.msra.mxu0 %v1204
  %1762 = vmatmul.bf16.gmra.mxu0 %v37
  %v1763 = vpop.f32.mrf.mxu0
  %v1764 = vadd.f32 0.0, %v1763
  %v1765 = vpop.f32.mrf.mxu0
  %1766 = vdwg.mxu0
  %1767 = vmatpush.bf16.msra.mxu0 %v1384
  %1768 = vmatpush.bf16.msra.mxu0 %v1372
  %1769 = vmatpush.bf16.msra.mxu0 %v1360
  %1770 = vmatpush.bf16.msra.mxu0 %v1348
  %1771 = vmatpush.bf16.msra.mxu0 %v1336
  %1772 = vmatpush.bf16.msra.mxu0 %v1324
  %1773 = vmatpush.bf16.msra.mxu0 %v1312
  %1774 = vmatpush.bf16.msra.mxu0 %v1300
  %1775 = vmatmul.bf16.gmra.mxu0 %v38
  %v1776 = vpop.f32.mrf.mxu0
  %v1777 = vadd.f32 %v1764, %v1776
  %v1778 = vpop.f32.mrf.mxu0
  %1779 = vdwg.mxu0
  %1780 = vmatpush.bf16.msra.mxu0 0
  %1781 = vmatpush.bf16.msra.mxu0 0
  %1782 = vmatpush.bf16.msra.mxu0 0
  %1783 = vmatpush.bf16.msra.mxu0 0
  %1784 = vmatpush.bf16.msra.mxu0 0
  %1785 = vmatpush.bf16.msra.mxu0 0
  %1786 = vmatpush.bf16.msra.mxu0 %v1408
  %1787 = vmatpush.bf16.msra.mxu0 %v1396
  %1788 = vmatmul.bf16.gmra.mxu0 %v1635
  %v1789 = vpop.f32.mrf.mxu0
  %v1790 = vadd.f32 %v1777, %v1789
  %v1791 = vpop.f32.mrf.mxu0
  %1792 = vdwg.mxu0
  %1793 = vmatpush.bf16.msra.mxu0 %v1289
  %1794 = vmatpush.bf16.msra.mxu0 %v1277
  %1795 = vmatpush.bf16.msra.mxu0 %v1265
  %1796 = vmatpush.bf16.msra.mxu0 %v1253
  %1797 = vmatpush.bf16.msra.mxu0 %v1241
  %1798 = vmatpush.bf16.msra.mxu0 %v1229
  %1799 = vmatpush.bf16.msra.mxu0 %v1217
  %1800 = vmatpush.bf16.msra.mxu0 %v1205
  %1801 = vmatmul.bf16.gmra.mxu0 %v37
  %v1802 = vpop.f32.mrf.mxu0
  %v1803 = vadd.f32 0.0, %v1802
  %v1804 = vpop.f32.mrf.mxu0
  %1805 = vdwg.mxu0
  %1806 = vmatpush.bf16.msra.mxu0 %v1385
  %1807 = vmatpush.bf16.msra.mxu0 %v1373
  %1808 = vmatpush.bf16.msra.mxu0 %v1361
  %1809 = vmatpush.bf16.msra.mxu0 %v1349
  %1810 = vmatpush.bf16.msra.mxu0 %v1337
  %1811 = vmatpush.bf16.msra.mxu0 %v1325
  %1812 = vmatpush.bf16.msra.mxu0 %v1313
  %1813 = vmatpush.bf16.msra.mxu0 %v1301
  %1814 = vmatmul.bf16.gmra.mxu0 %v38
  %v1815 = vpop.f32.mrf.mxu0
  %v1816 = vadd.f32 %v1803, %v1815
  %v1817 = vpop.f32.mrf.mxu0
  %1818 = vdwg.mxu0
  %1819 = vmatpush.bf16.msra.mxu0 0
  %1820 = vmatpush.bf16.msra.mxu0 0
  %1821 = vmatpush.bf16.msra.mxu0 0
  %1822 = vmatpush.bf16.msra.mxu0 0
  %1823 = vmatpush.bf16.msra.mxu0 0
  %1824 = vmatpush.bf16.msra.mxu0 0
  %1825 = vmatpush.bf16.msra.mxu0 %v1409
  %1826 = vmatpush.bf16.msra.mxu0 %v1397
  %1827 = vmatmul.bf16.gmra.mxu0 %v1635
  %v1828 = vpop.f32.mrf.mxu0
  %v1829 = vadd.f32 %v1816, %v1828
  %v1830 = vpop.f32.mrf.mxu0
  %1831 = vdwg.mxu0
  %1832 = vmatpush.bf16.msra.mxu0 %v1290
  %1833 = vmatpush.bf16.msra.mxu0 %v1278
  %1834 = vmatpush.bf16.msra.mxu0 %v1266
  %1835 = vmatpush.bf16.msra.mxu0 %v1254
  %1836 = vmatpush.bf16.msra.mxu0 %v1242
  %1837 = vmatpush.bf16.msra.mxu0 %v1230
  %1838 = vmatpush.bf16.msra.mxu0 %v1218
  %1839 = vmatpush.bf16.msra.mxu0 %v1206
  %1840 = vmatmul.bf16.gmra.mxu0 %v37
  %v1841 = vpop.f32.mrf.mxu0
  %v1842 = vadd.f32 0.0, %v1841
  %v1843 = vpop.f32.mrf.mxu0
  %1844 = vdwg.mxu0
  %1845 = vmatpush.bf16.msra.mxu0 %v1386
  %1846 = vmatpush.bf16.msra.mxu0 %v1374
  %1847 = vmatpush.bf16.msra.mxu0 %v1362
  %1848 = vmatpush.bf16.msra.mxu0 %v1350
  %1849 = vmatpush.bf16.msra.mxu0 %v1338
  %1850 = vmatpush.bf16.msra.mxu0 %v1326
  %1851 = vmatpush.bf16.msra.mxu0 %v1314
  %1852 = vmatpush.bf16.msra.mxu0 %v1302
  %1853 = vmatmul.bf16.gmra.mxu0 %v38
  %v1854 = vpop.f32.mrf.mxu0
  %v1855 = vadd.f32 %v1842, %v1854
  %v1856 = vpop.f32.mrf.mxu0
  %1857 = vdwg.mxu0
  %1858 = vmatpush.bf16.msra.mxu0 0
  %1859 = vmatpush.bf16.msra.mxu0 0
  %1860 = vmatpush.bf16.msra.mxu0 0
  %1861 = vmatpush.bf16.msra.mxu0 0
  %1862 = vmatpush.bf16.msra.mxu0 0
  %1863 = vmatpush.bf16.msra.mxu0 0
  %1864 = vmatpush.bf16.msra.mxu0 %v1410
  %1865 = vmatpush.bf16.msra.mxu0 %v1398
  %1866 = vmatmul.bf16.gmra.mxu0 %v1635
  %v1867 = vpop.f32.mrf.mxu0
  %v1868 = vadd.f32 %v1855, %v1867
  %v1869 = vpop.f32.mrf.mxu0
  %1870 = vdwg.mxu0
  %1871 = vmatpush.bf16.msra.mxu0 %v1291
  %1872 = vmatpush.bf16.msra.mxu0 %v1279
  %1873 = vmatpush.bf16.msra.mxu0 %v1267
  %1874 = vmatpush.bf16.msra.mxu0 %v1255
  %1875 = vmatpush.bf16.msra.mxu0 %v1243
  %1876 = vmatpush.bf16.msra.mxu0 %v1231
  %1877 = vmatpush.bf16.msra.mxu0 %v1219
  %1878 = vmatpush.bf16.msra.mxu0 %v1207
  %1879 = vmatmul.bf16.gmra.mxu0 %v37
  %v1880 = vpop.f32.mrf.mxu0
  %v1881 = vadd.f32 0.0, %v1880
  %v1882 = vpop.f32.mrf.mxu0
  %1883 = vdwg.mxu0
  %1884 = vmatpush.bf16.msra.mxu0 %v1387
  %1885 = vmatpush.bf16.msra.mxu0 %v1375
  %1886 = vmatpush.bf16.msra.mxu0 %v1363
  %1887 = vmatpush.bf16.msra.mxu0 %v1351
  %1888 = vmatpush.bf16.msra.mxu0 %v1339
  %1889 = vmatpush.bf16.msra.mxu0 %v1327
  %1890 = vmatpush.bf16.msra.mxu0 %v1315
  %1891 = vmatpush.bf16.msra.mxu0 %v1303
  %1892 = vmatmul.bf16.gmra.mxu0 %v38
  %v1893 = vpop.f32.mrf.mxu0
  %v1894 = vadd.f32 %v1881, %v1893
  %v1895 = vpop.f32.mrf.mxu0
  %1896 = vdwg.mxu0
  %1897 = vmatpush.bf16.msra.mxu0 0
  %1898 = vmatpush.bf16.msra.mxu0 0
  %1899 = vmatpush.bf16.msra.mxu0 0
  %1900 = vmatpush.bf16.msra.mxu0 0
  %1901 = vmatpush.bf16.msra.mxu0 0
  %1902 = vmatpush.bf16.msra.mxu0 0
  %1903 = vmatpush.bf16.msra.mxu0 %v1411
  %1904 = vmatpush.bf16.msra.mxu0 %v1399
  %1905 = vmatmul.bf16.gmra.mxu0 %v1635
  %v1906 = vpop.f32.mrf.mxu0
  %v1907 = vadd.f32 %v1894, %v1906
  %v1908 = vpop.f32.mrf.mxu0
  %1909 = vdwg.mxu0
  %1910 = vmatpush.bf16.msra.mxu0 %v1292
  %1911 = vmatpush.bf16.msra.mxu0 %v1280
  %1912 = vmatpush.bf16.msra.mxu0 %v1268
  %1913 = vmatpush.bf16.msra.mxu0 %v1256
  %1914 = vmatpush.bf16.msra.mxu0 %v1244
  %1915 = vmatpush.bf16.msra.mxu0 %v1232
  %1916 = vmatpush.bf16.msra.mxu0 %v1220
  %1917 = vmatpush.bf16.msra.mxu0 %v1208
  %1918 = vmatmul.bf16.gmra.mxu0 %v37
  %v1919 = vpop.f32.mrf.mxu0
  %v1920 = vadd.f32 0.0, %v1919
  %v1921 = vpop.f32.mrf.mxu0
  %1922 = vdwg.mxu0
  %1923 = vmatpush.bf16.msra.mxu0 %v1388
  %1924 = vmatpush.bf16.msra.mxu0 %v1376
  %1925 = vmatpush.bf16.msra.mxu0 %v1364
  %1926 = vmatpush.bf16.msra.mxu0 %v1352
  %1927 = vmatpush.bf16.msra.mxu0 %v1340
  %1928 = vmatpush.bf16.msra.mxu0 %v1328
  %1929 = vmatpush.bf16.msra.mxu0 %v1316
  %1930 = vmatpush.bf16.msra.mxu0 %v1304
  %1931 = vmatmul.bf16.gmra.mxu0 %v38
  %v1932 = vpop.f32.mrf.mxu0
  %v1933 = vadd.f32 %v1920, %v1932
  %v1934 = vpop.f32.mrf.mxu0
  %1935 = vdwg.mxu0
  %1936 = vmatpush.bf16.msra.mxu0 0
  %1937 = vmatpush.bf16.msra.mxu0 0
  %1938 = vmatpush.bf16.msra.mxu0 0
  %1939 = vmatpush.bf16.msra.mxu0 0
  %1940 = vmatpush.bf16.msra.mxu0 0
  %1941 = vmatpush.bf16.msra.mxu0 0
  %1942 = vmatpush.bf16.msra.mxu0 %v1412
  %1943 = vmatpush.bf16.msra.mxu0 %v1400
  %1944 = vmatmul.bf16.gmra.mxu0 %v1635
  %v1945 = vpop.f32.mrf.mxu0
  %v1946 = vadd.f32 %v1933, %v1945
  %v1947 = vpop.f32.mrf.mxu0
  %1948 = vdwg.mxu0
  %1949 = vmatpush.bf16.msra.mxu0 %v1293
  %1950 = vmatpush.bf16.msra.mxu0 %v1281
  %1951 = vmatpush.bf16.msra.mxu0 %v1269
  %1952 = vmatpush.bf16.msra.mxu0 %v1257
  %1953 = vmatpush.bf16.msra.mxu0 %v1245
  %1954 = vmatpush.bf16.msra.mxu0 %v1233
  %1955 = vmatpush.bf16.msra.mxu0 %v1221
  %1956 = vmatpush.bf16.msra.mxu0 %v1209
  %1957 = vmatmul.bf16.gmra.mxu0 %v37
  %v1958 = vpop.f32.mrf.mxu0
  %v1959 = vadd.f32 0.0, %v1958
  %v1960 = vpop.f32.mrf.mxu0
  %1961 = vdwg.mxu0
  %1962 = vmatpush.bf16.msra.mxu0 %v1389
  %1963 = vmatpush.bf16.msra.mxu0 %v1377
  %1964 = vmatpush.bf16.msra.mxu0 %v1365
  %1965 = vmatpush.bf16.msra.mxu0 %v1353
  %1966 = vmatpush.bf16.msra.mxu0 %v1341
  %1967 = vmatpush.bf16.msra.mxu0 %v1329
  %1968 = vmatpush.bf16.msra.mxu0 %v1317
  %1969 = vmatpush.bf16.msra.mxu0 %v1305
  %1970 = vmatmul.bf16.gmra.mxu0 %v38
  %v1971 = vpop.f32.mrf.mxu0
  %v1972 = vadd.f32 %v1959, %v1971
  %v1973 = vpop.f32.mrf.mxu0
  %1974 = vdwg.mxu0
  %1975 = vmatpush.bf16.msra.mxu0 0
  %1976 = vmatpush.bf16.msra.mxu0 0
  %1977 = vmatpush.bf16.msra.mxu0 0
  %1978 = vmatpush.bf16.msra.mxu0 0
  %1979 = vmatpush.bf16.msra.mxu0 0
  %1980 = vmatpush.bf16.msra.mxu0 0
  %1981 = vmatpush.bf16.msra.mxu0 %v1413
  %1982 = vmatpush.bf16.msra.mxu0 %v1401
  %1983 = vmatmul.bf16.gmra.mxu0 %v1635
  %v1984 = vpop.f32.mrf.mxu0
  %v1985 = vadd.f32 %v1972, %v1984
  %v1986 = vpop.f32.mrf.mxu0
  %1987 = vdwg.mxu0
  %1988 = vmatpush.bf16.msra.mxu0 %v1294
  %1989 = vmatpush.bf16.msra.mxu0 %v1282
  %1990 = vmatpush.bf16.msra.mxu0 %v1270
  %1991 = vmatpush.bf16.msra.mxu0 %v1258
  %1992 = vmatpush.bf16.msra.mxu0 %v1246
  %1993 = vmatpush.bf16.msra.mxu0 %v1234
  %1994 = vmatpush.bf16.msra.mxu0 %v1222
  %1995 = vmatpush.bf16.msra.mxu0 %v1210
  %1996 = vmatmul.bf16.gmra.mxu0 %v37
  %v1997 = vpop.f32.mrf.mxu0
  %v1998 = vadd.f32 0.0, %v1997
  %v1999 = vpop.f32.mrf.mxu0
  %2000 = vdwg.mxu0
  %2001 = vmatpush.bf16.msra.mxu0 %v1390
  %2002 = vmatpush.bf16.msra.mxu0 %v1378
  %2003 = vmatpush.bf16.msra.mxu0 %v1366
  %2004 = vmatpush.bf16.msra.mxu0 %v1354
  %2005 = vmatpush.bf16.msra.mxu0 %v1342
  %2006 = vmatpush.bf16.msra.mxu0 %v1330
  %2007 = vmatpush.bf16.msra.mxu0 %v1318
  %2008 = vmatpush.bf16.msra.mxu0 %v1306
  %2009 = vmatmul.bf16.gmra.mxu0 %v38
  %v2010 = vpop.f32.mrf.mxu0
  %v2011 = vadd.f32 %v1998, %v2010
  %v2012 = vpop.f32.mrf.mxu0
  %2013 = vdwg.mxu0
  %2014 = vmatpush.bf16.msra.mxu0 0
  %2015 = vmatpush.bf16.msra.mxu0 0
  %2016 = vmatpush.bf16.msra.mxu0 0
  %2017 = vmatpush.bf16.msra.mxu0 0
  %2018 = vmatpush.bf16.msra.mxu0 0
  %2019 = vmatpush.bf16.msra.mxu0 0
  %2020 = vmatpush.bf16.msra.mxu0 %v1414
  %2021 = vmatpush.bf16.msra.mxu0 %v1402
  %2022 = vmatmul.bf16.gmra.mxu0 %v1635
  %v2023 = vpop.f32.mrf.mxu0
  %v2024 = vadd.f32 %v2011, %v2023
  %v2025 = vpop.f32.mrf.mxu0
  %2026 = vdwg.mxu0
  %2027 = vmatpush.bf16.msra.mxu0 %v1295
  %2028 = vmatpush.bf16.msra.mxu0 %v1283
  %2029 = vmatpush.bf16.msra.mxu0 %v1271
  %2030 = vmatpush.bf16.msra.mxu0 %v1259
  %2031 = vmatpush.bf16.msra.mxu0 %v1247
  %2032 = vmatpush.bf16.msra.mxu0 %v1235
  %2033 = vmatpush.bf16.msra.mxu0 %v1223
  %2034 = vmatpush.bf16.msra.mxu0 %v1211
  %2035 = vmatmul.bf16.gmra.mxu0 %v37
  %v2036 = vpop.f32.mrf.mxu0
  %v2037 = vadd.f32 0.0, %v2036
  %v2038 = vpop.f32.mrf.mxu0
  %2039 = vdwg.mxu0
  %2040 = vmatpush.bf16.msra.mxu0 %v1391
  %2041 = vmatpush.bf16.msra.mxu0 %v1379
  %2042 = vmatpush.bf16.msra.mxu0 %v1367
  %2043 = vmatpush.bf16.msra.mxu0 %v1355
  %2044 = vmatpush.bf16.msra.mxu0 %v1343
  %2045 = vmatpush.bf16.msra.mxu0 %v1331
  %2046 = vmatpush.bf16.msra.mxu0 %v1319
  %2047 = vmatpush.bf16.msra.mxu0 %v1307
  %2048 = vmatmul.bf16.gmra.mxu0 %v38
  %v2049 = vpop.f32.mrf.mxu0
  %v2050 = vadd.f32 %v2037, %v2049
  %v2051 = vpop.f32.mrf.mxu0
  %2052 = vdwg.mxu0
  %2053 = vmatpush.bf16.msra.mxu0 0
  %2054 = vmatpush.bf16.msra.mxu0 0
  %2055 = vmatpush.bf16.msra.mxu0 0
  %2056 = vmatpush.bf16.msra.mxu0 0
  %2057 = vmatpush.bf16.msra.mxu0 0
  %2058 = vmatpush.bf16.msra.mxu0 0
  %2059 = vmatpush.bf16.msra.mxu0 %v1415
  %2060 = vmatpush.bf16.msra.mxu0 %v1403
  %2061 = vmatmul.bf16.gmra.mxu0 %v1635
  %v2062 = vpop.f32.mrf.mxu0
  %v2063 = vadd.f32 %v2050, %v2062
  %v2064 = vpop.f32.mrf.mxu0
  %2065 = vdwg.mxu0
  %2066 = vmatpush.bf16.msra.mxu0 %v1296
  %2067 = vmatpush.bf16.msra.mxu0 %v1284
  %2068 = vmatpush.bf16.msra.mxu0 %v1272
  %2069 = vmatpush.bf16.msra.mxu0 %v1260
  %2070 = vmatpush.bf16.msra.mxu0 %v1248
  %2071 = vmatpush.bf16.msra.mxu0 %v1236
  %2072 = vmatpush.bf16.msra.mxu0 %v1224
  %2073 = vmatpush.bf16.msra.mxu0 %v1212
  %2074 = vmatmul.bf16.gmra.mxu0 %v37
  %v2075 = vpop.f32.mrf.mxu0
  %v2076 = vadd.f32 0.0, %v2075
  %v2077 = vpop.f32.mrf.mxu0
  %2078 = vdwg.mxu0
  %2079 = vmatpush.bf16.msra.mxu0 %v1392
  %2080 = vmatpush.bf16.msra.mxu0 %v1380
  %2081 = vmatpush.bf16.msra.mxu0 %v1368
  %2082 = vmatpush.bf16.msra.mxu0 %v1356
  %2083 = vmatpush.bf16.msra.mxu0 %v1344
  %2084 = vmatpush.bf16.msra.mxu0 %v1332
  %2085 = vmatpush.bf16.msra.mxu0 %v1320
  %2086 = vmatpush.bf16.msra.mxu0 %v1308
  %2087 = vmatmul.bf16.gmra.mxu0 %v38
  %v2088 = vpop.f32.mrf.mxu0
  %v2089 = vadd.f32 %v2076, %v2088
  %v2090 = vpop.f32.mrf.mxu0
  %2091 = vdwg.mxu0
  %2092 = vmatpush.bf16.msra.mxu0 0
  %2093 = vmatpush.bf16.msra.mxu0 0
  %2094 = vmatpush.bf16.msra.mxu0 0
  %2095 = vmatpush.bf16.msra.mxu0 0
  %2096 = vmatpush.bf16.msra.mxu0 0
  %2097 = vmatpush.bf16.msra.mxu0 0
  %2098 = vmatpush.bf16.msra.mxu0 %v1416
  %2099 = vmatpush.bf16.msra.mxu0 %v1404
  %2100 = vmatmul.bf16.gmra.mxu0 %v1635
  %v2101 = vpop.f32.mrf.mxu0
  %v2102 = vadd.f32 %v2089, %v2101
  %v2103 = vpop.f32.mrf.mxu0
  %2104 = vdwg.mxu0
  %v2105 = vadd.f32 %v325, %v1673
  %v2106 = vadd.f32 %v326, %v1712
  %v2107 = vadd.f32 %v327, %v1751
  %v2108 = vadd.f32 %v328, %v1790
  %v2109 = vadd.f32 %v329, %v1829
  %v2110 = vadd.f32 %v330, %v1868
  %v2111 = vadd.f32 %v331, %v1907
  %v2112 = vadd.f32 %v332, %v1946
  %v2113 = vadd.f32 %v333, %v1985
  %v2114 = vadd.f32 %v334, %v2024
  %v2115 = vadd.f32 %v335, %v2063
  %v2116 = vadd.f32 %v336, %v2102
  %v2121 = vrot.slane %v329, 6
  %v2122 = vrot.slane %v330, 6
  %v2123 = vrot.slane %v331, 6
  %v2124 = vrot.slane %v332, 6
  %v2133 = vrot.slane %v333, 4
  %v2134 = vrot.slane %v334, 4
  %v2135 = vrot.slane %v335, 4
  %v2136 = vrot.slane %v336, 4
  %vm2141 = vcmask 1041408
  %v2142 = vsel %vm2141, %v325, %v2121
  %v2143 = vsel %vm2141, %v326, %v2122
  %v2144 = vsel %vm2141, %v327, %v2123
  %v2145 = vsel %vm2141, %v328, %v2124
  %vm2146 = vcmask 1043456
  %v2147 = vsel %vm2146, %v2142, %v2133
  %v2148 = vsel %vm2146, %v2143, %v2134
  %v2149 = vsel %vm2146, %v2144, %v2135
  %v2150 = vsel %vm2146, %v2145, %v2136
  %v2155 = vrot.slane %v2109, 6
  %v2156 = vrot.slane %v2110, 6
  %v2157 = vrot.slane %v2111, 6
  %v2158 = vrot.slane %v2112, 6
  %v2167 = vrot.slane %v2113, 4
  %v2168 = vrot.slane %v2114, 4
  %v2169 = vrot.slane %v2115, 4
  %v2170 = vrot.slane %v2116, 4
  %v2175 = vsel %vm2141, %v2105, %v2155
  %v2176 = vsel %vm2141, %v2106, %v2156
  %v2177 = vsel %vm2141, %v2107, %v2157
  %v2178 = vsel %vm2141, %v2108, %v2158
  %v2179 = vsel %vm2146, %v2175, %v2167
  %v2180 = vsel %vm2146, %v2176, %v2168
  %v2181 = vsel %vm2146, %v2177, %v2169
  %v2182 = vsel %vm2146, %v2178, %v2170
  %2183 = vst [vmem:[%s6] sm:$0x3f] %v2179
  %2184 = vst [vmem:[%s6 + $0x8] sm:$0x3f] %v2180
  %2185 = vst [vmem:[%s6 + $0x10] sm:$0x3f] %v2181
  %2186 = vst [vmem:[%s6 + $0x18] sm:$0x3f] %v2182
  %v2187 = vpack.c.bf16 %v2147, %v2147
  %v2188 = vpack.c.bf16 %v2148, %v2148
  %v2189 = vpack.c.bf16 %v2149, %v2149
  %v2190 = vpack.c.bf16 %v2150, %v2150
  %v2191 = vld [vmem:[%s5] sm:$0xf]
  %v2192 = vld [vmem:[%s5 + $0x4] sm:$0xf]
  %v2193 = vld [vmem:[%s5 + $0x8] sm:$0xf]
  %v2194 = vld [vmem:[%s5 + $0xc] sm:$0xf]
  %v2195 = vld [vmem:[%s5 + $0x10] sm:$0xf]
  %v2196 = vld [vmem:[%s5 + $0x14] sm:$0xf]
  %v2197 = vld [vmem:[%s5 + $0x18] sm:$0xf]
  %v2198 = vld [vmem:[%s5 + $0x1c] sm:$0xf]
  %v2199 = vld [vmem:[%s5 + $0x20] sm:$0xf]
  %v2200 = vld [vmem:[%s5 + $0x24] sm:$0xf]
  %v2201 = vld [vmem:[%s5 + $0x28] sm:$0xf]
  %v2202 = vld [vmem:[%s5 + $0x2c] sm:$0xf]
  %v2203 = vld [vmem:[%s5 + $0x30] sm:$0xf]
  %v2204 = vld [vmem:[%s5 + $0x34] sm:$0xf]
  %v2205 = vld [vmem:[%s5 + $0x38] sm:$0xf]
  %v2206 = vld [vmem:[%s5 + $0x3c] sm:$0xf]
  %v2207 = vld [vmem:[%s5 + $0x40] sm:$0xf]
  %v2208 = vld [vmem:[%s5 + $0x44] sm:$0xf]
  %v2209 = vld [vmem:[%s5 + $0x48] sm:$0xf]
  %v2210 = vld [vmem:[%s5 + $0x4c] sm:$0xf]
  %v2211 = vld [vmem:[%s5 + $0x50] sm:$0xf]
  %v2212 = vld [vmem:[%s5 + $0x54] sm:$0xf]
  %v2213 = vld [vmem:[%s5 + $0x58] sm:$0xf]
  %v2214 = vld [vmem:[%s5 + $0x5c] sm:$0xf]
  %v2215 = vld [vmem:[%s5 + $0x60] sm:$0xf]
  %v2216 = vld [vmem:[%s5 + $0x64] sm:$0xf]
  %v2217 = vld [vmem:[%s5 + $0x68] sm:$0xf]
  %v2218 = vld [vmem:[%s5 + $0x6c] sm:$0xf]
  %v2219 = vld [vmem:[%s5 + $0x70] sm:$0xf]
  %v2220 = vld [vmem:[%s5 + $0x74] sm:$0xf]
  %v2221 = vld [vmem:[%s5 + $0x78] sm:$0xf]
  %v2222 = vld [vmem:[%s5 + $0x7c] sm:$0xf]
  %v2223 = vld [vmem:[%s5 + $0x80] sm:$0xf]
  %v2224 = vld [vmem:[%s5 + $0x84] sm:$0xf]
  %v2225 = vld [vmem:[%s5 + $0x88] sm:$0xf]
  %v2226 = vld [vmem:[%s5 + $0x8c] sm:$0xf]
  %v2227 = vld [vmem:[%s5 + $0x90] sm:$0xf]
  %v2228 = vld [vmem:[%s5 + $0x94] sm:$0xf]
  %v2229 = vld [vmem:[%s5 + $0x98] sm:$0xf]
  %v2230 = vld [vmem:[%s5 + $0x9c] sm:$0xf]
  %v2231 = vld [vmem:[%s5 + $0xa0] sm:$0xf]
  %v2232 = vld [vmem:[%s5 + $0xa4] sm:$0xf]
  %v2233 = vld [vmem:[%s5 + $0xa8] sm:$0xf]
  %v2234 = vld [vmem:[%s5 + $0xac] sm:$0xf]
  %v2235 = vld [vmem:[%s5 + $0xb0] sm:$0xf]
  %v2236 = vld [vmem:[%s5 + $0xb4] sm:$0xf]
  %v2237 = vld [vmem:[%s5 + $0xb8] sm:$0xf]
  %v2238 = vld [vmem:[%s5 + $0xbc] sm:$0xf]
  %v2239 = vld [vmem:[%s5 + $0xc0] sm:$0xf]
  %v2240 = vld [vmem:[%s5 + $0xc4] sm:$0xf]
  %v2241 = vld [vmem:[%s5 + $0xc8] sm:$0xf]
  %v2242 = vld [vmem:[%s5 + $0xcc] sm:$0xf]
  %v2243 = vld [vmem:[%s5 + $0xd0] sm:$0xf]
  %v2244 = vld [vmem:[%s5 + $0xd4] sm:$0xf]
  %v2245 = vld [vmem:[%s5 + $0xd8] sm:$0xf]
  %v2246 = vld [vmem:[%s5 + $0xdc] sm:$0xf]
  %v2247 = vld [vmem:[%s5 + $0xe0] sm:$0xf]
  %v2248 = vld [vmem:[%s5 + $0xe4] sm:$0xf]
  %v2249 = vld [vmem:[%s5 + $0xe8] sm:$0xf]
  %v2250 = vld [vmem:[%s5 + $0xec] sm:$0xf]
  %v2251 = vld [vmem:[%s5 + $0xf0] sm:$0xf]
  %v2252 = vld [vmem:[%s5 + $0xf4] sm:$0xf]
  %v2253 = vld [vmem:[%s5 + $0xf8] sm:$0xf]
  %v2254 = vld [vmem:[%s5 + $0xfc] sm:$0xf]
  %v2319 = vunpack.c.l.b16 %v2191
  %v2320 = vunpack.c.l.b16 %v2192
  %v2321 = vunpack.c.l.b16 %v2193
  %v2322 = vunpack.c.l.b16 %v2194
  %v2323 = vunpack.c.l.b16 %v2195
  %v2324 = vunpack.c.l.b16 %v2196
  %v2325 = vunpack.c.l.b16 %v2197
  %v2326 = vunpack.c.l.b16 %v2198
  %v2327 = vunpack.c.l.b16 %v2199
  %v2328 = vunpack.c.l.b16 %v2200
  %v2329 = vunpack.c.l.b16 %v2201
  %v2330 = vunpack.c.l.b16 %v2202
  %v2331 = vunpack.c.l.b16 %v2203
  %v2332 = vunpack.c.l.b16 %v2204
  %v2333 = vunpack.c.l.b16 %v2205
  %v2334 = vunpack.c.l.b16 %v2206
  %v2335 = vunpack.c.l.b16 %v2207
  %v2336 = vunpack.c.l.b16 %v2208
  %v2337 = vunpack.c.l.b16 %v2209
  %v2338 = vunpack.c.l.b16 %v2210
  %v2339 = vunpack.c.l.b16 %v2211
  %v2340 = vunpack.c.l.b16 %v2212
  %v2341 = vunpack.c.l.b16 %v2213
  %v2342 = vunpack.c.l.b16 %v2214
  %v2343 = vunpack.c.l.b16 %v2215
  %v2344 = vunpack.c.l.b16 %v2216
  %v2345 = vunpack.c.l.b16 %v2217
  %v2346 = vunpack.c.l.b16 %v2218
  %v2347 = vunpack.c.l.b16 %v2219
  %v2348 = vunpack.c.l.b16 %v2220
  %v2349 = vunpack.c.l.b16 %v2221
  %v2350 = vunpack.c.l.b16 %v2222
  %v2351 = vunpack.c.l.b16 %v2223
  %v2352 = vunpack.c.l.b16 %v2224
  %v2353 = vunpack.c.l.b16 %v2225
  %v2354 = vunpack.c.l.b16 %v2226
  %v2355 = vunpack.c.l.b16 %v2227
  %v2356 = vunpack.c.l.b16 %v2228
  %v2357 = vunpack.c.l.b16 %v2229
  %v2358 = vunpack.c.l.b16 %v2230
  %v2359 = vunpack.c.l.b16 %v2231
  %v2360 = vunpack.c.l.b16 %v2232
  %v2361 = vunpack.c.l.b16 %v2233
  %v2362 = vunpack.c.l.b16 %v2234
  %v2363 = vunpack.c.l.b16 %v2235
  %v2364 = vunpack.c.l.b16 %v2236
  %v2365 = vunpack.c.l.b16 %v2237
  %v2366 = vunpack.c.l.b16 %v2238
  %v2367 = vunpack.c.l.b16 %v2239
  %v2368 = vunpack.c.l.b16 %v2240
  %v2369 = vunpack.c.l.b16 %v2241
  %v2370 = vunpack.c.l.b16 %v2242
  %v2371 = vunpack.c.l.b16 %v2243
  %v2372 = vunpack.c.l.b16 %v2244
  %v2373 = vunpack.c.l.b16 %v2245
  %v2374 = vunpack.c.l.b16 %v2246
  %v2375 = vunpack.c.l.b16 %v2247
  %v2376 = vunpack.c.l.b16 %v2248
  %v2377 = vunpack.c.l.b16 %v2249
  %v2378 = vunpack.c.l.b16 %v2250
  %v2379 = vunpack.c.l.b16 %v2251
  %v2380 = vunpack.c.l.b16 %v2252
  %v2381 = vunpack.c.l.b16 %v2253
  %v2382 = vunpack.c.l.b16 %v2254
  %v2383 = vpack.c.b16 %v2320, %v2319
  %v2384 = vpack.c.b16 %v2322, %v2321
  %v2385 = vpack.c.b16 %v2324, %v2323
  %v2386 = vpack.c.b16 %v2326, %v2325
  %v2387 = vpack.c.b16 %v2328, %v2327
  %v2388 = vpack.c.b16 %v2330, %v2329
  %v2389 = vpack.c.b16 %v2332, %v2331
  %v2390 = vpack.c.b16 %v2334, %v2333
  %v2391 = vpack.c.b16 %v2336, %v2335
  %v2392 = vpack.c.b16 %v2338, %v2337
  %v2393 = vpack.c.b16 %v2340, %v2339
  %v2394 = vpack.c.b16 %v2342, %v2341
  %v2395 = vpack.c.b16 %v2344, %v2343
  %v2396 = vpack.c.b16 %v2346, %v2345
  %v2397 = vpack.c.b16 %v2348, %v2347
  %v2398 = vpack.c.b16 %v2350, %v2349
  %v2399 = vpack.c.b16 %v2352, %v2351
  %v2400 = vpack.c.b16 %v2354, %v2353
  %v2401 = vpack.c.b16 %v2356, %v2355
  %v2402 = vpack.c.b16 %v2358, %v2357
  %v2403 = vpack.c.b16 %v2360, %v2359
  %v2404 = vpack.c.b16 %v2362, %v2361
  %v2405 = vpack.c.b16 %v2364, %v2363
  %v2406 = vpack.c.b16 %v2366, %v2365
  %v2407 = vpack.c.b16 %v2368, %v2367
  %v2408 = vpack.c.b16 %v2370, %v2369
  %v2409 = vpack.c.b16 %v2372, %v2371
  %v2410 = vpack.c.b16 %v2374, %v2373
  %v2411 = vpack.c.b16 %v2376, %v2375
  %v2412 = vpack.c.b16 %v2378, %v2377
  %v2413 = vpack.c.b16 %v2380, %v2379
  %v2414 = vpack.c.b16 %v2382, %v2381
  %2447 = vmatpush.bf16.msra.mxu0 %v2390
  %2448 = vmatpush.bf16.msra.mxu0 %v2389
  %2449 = vmatpush.bf16.msra.mxu0 %v2388
  %2450 = vmatpush.bf16.msra.mxu0 %v2387
  %2451 = vmatpush.bf16.msra.mxu0 %v2386
  %2452 = vmatpush.bf16.msra.mxu0 %v2385
  %2453 = vmatpush.bf16.msra.mxu0 %v2384
  %2454 = vmatpush.bf16.msra.mxu0 %v2383
  %2455 = vmatmul.bf16.gmra.mxu0 %v2187
  %v2456 = vpop.f32.mrf.mxu0
  %v2457 = vadd.f32 0.0, %v2456
  %v2458 = vpop.f32.mrf.mxu0
  %2459 = vdwg.mxu0
  %2460 = vmatpush.bf16.msra.mxu0 %v2398
  %2461 = vmatpush.bf16.msra.mxu0 %v2397
  %2462 = vmatpush.bf16.msra.mxu0 %v2396
  %2463 = vmatpush.bf16.msra.mxu0 %v2395
  %2464 = vmatpush.bf16.msra.mxu0 %v2394
  %2465 = vmatpush.bf16.msra.mxu0 %v2393
  %2466 = vmatpush.bf16.msra.mxu0 %v2392
  %2467 = vmatpush.bf16.msra.mxu0 %v2391
  %2468 = vmatmul.bf16.gmra.mxu0 %v2188
  %v2469 = vpop.f32.mrf.mxu0
  %v2470 = vadd.f32 %v2457, %v2469
  %v2471 = vpop.f32.mrf.mxu0
  %2472 = vdwg.mxu0
  %2473 = vmatpush.bf16.msra.mxu0 %v2406
  %2474 = vmatpush.bf16.msra.mxu0 %v2405
  %2475 = vmatpush.bf16.msra.mxu0 %v2404
  %2476 = vmatpush.bf16.msra.mxu0 %v2403
  %2477 = vmatpush.bf16.msra.mxu0 %v2402
  %2478 = vmatpush.bf16.msra.mxu0 %v2401
  %2479 = vmatpush.bf16.msra.mxu0 %v2400
  %2480 = vmatpush.bf16.msra.mxu0 %v2399
  %2481 = vmatmul.bf16.gmra.mxu0 %v2189
  %v2482 = vpop.f32.mrf.mxu0
  %v2483 = vadd.f32 %v2470, %v2482
  %v2484 = vpop.f32.mrf.mxu0
  %2485 = vdwg.mxu0
  %2486 = vmatpush.bf16.msra.mxu0 %v2414
  %2487 = vmatpush.bf16.msra.mxu0 %v2413
  %2488 = vmatpush.bf16.msra.mxu0 %v2412
  %2489 = vmatpush.bf16.msra.mxu0 %v2411
  %2490 = vmatpush.bf16.msra.mxu0 %v2410
  %2491 = vmatpush.bf16.msra.mxu0 %v2409
  %2492 = vmatpush.bf16.msra.mxu0 %v2408
  %2493 = vmatpush.bf16.msra.mxu0 %v2407
  %2494 = vmatmul.bf16.gmra.mxu0 %v2190
  %v2495 = vpop.f32.mrf.mxu0
  %v2496 = vadd.f32 %v2483, %v2495
  %v2497 = vpop.f32.mrf.mxu0
  %2498 = vdwg.mxu0
  %2499 = vst [vmem:[%s7] sm:$0x3f] %v2496
  // Predicated region
  $region26: #{_lambda_.2} parent=0 // pred_check
    _
  $region27: #{_lambda_.2} parent=0 // pred_check_branch
    %2501 = sbr.rel (0) target = $region29
  $region28: #{_lambda_.2} parent=0 // pred_region
    _
  $region29: #{_lambda_.2} parent=0 // pred_fallthru
    _
  // Predicated region
  $region30: #{_lambda_.2} parent=0 // pred_check
    _
  $region31: #{_lambda_.2} parent=0 // pred_check_branch
    %2503 = sbr.rel (0) target = $region33
  $region32: #{_lambda_.2} parent=0 // pred_region
    _
  $region33: #{_lambda_.2} parent=0 // pred_fallthru
    _
  // Predicated region
  $region34: #{_lambda_.2} parent=0 // pred_check
    _
  $region35: #{_lambda_.2} parent=0 // pred_check_branch
    %2505 = sbr.rel (0) target = $region37
  $region36: #{_lambda_.2} parent=0 // pred_region
    _
  $region37: #{_lambda_.2} parent=0 // pred_fallthru
    _
  // Predicated region
  $region38: #{_lambda_.2} parent=0 // pred_check
    _
  $region39: #{_lambda_.2} parent=0 // pred_check_branch
    %2507 = sbr.rel (0) target = $region41
  $region40: #{_lambda_.2} parent=0 // pred_region
    _
  $region41: #{_lambda_.2} parent=0 // pred_fallthru
    _

// kernel: _lambda_.3
$region0: #{_lambda_.3}
  #allocation0 [shape = 'u32[]', space=smem, size = 0x4, offset = 0x4, fixed_abs, tag = 'smem constant byte address 0x4 - core index']
  #allocation1 [shape = 'u32[72,128]{1,0:T(1,128)}', space=vmem, size = 0x9000, scoped, tag = 'internal scratch']
  %s0 = inlined_call_operand.vmem [shape: f32[24,33], index: 0, kind: input, shape index: {}]
  %s1 = inlined_call_operand.vmem [shape: bf16[33,512], index: 1, kind: input, shape index: {}]
  %s2 = inlined_call_operand.vmem [shape: f32[6,512], index: 2, kind: input, shape index: {}]
  %s3 = inlined_call_operand.vmem [shape: f32[6,512], index: 3, kind: output, shape index: {}]
  %s4 = sld [smem:[#allocation0]]
  $region22: #{_lambda_.3} parent=0
    _
  %s6 = ssub.s32 1, %s4
  %s7 = scalar_select 0, %s6, %s4
  // Predicated region
  $region2: #{_lambda_.3} parent=0 // pred_check
    _
  $region3: #{_lambda_.3} parent=0 // pred_check_branch
    %9 = sbr.rel (0) target = $region5
  $region4: #{_lambda_.3} parent=0 // pred_region
    _
  $region5: #{_lambda_.3} parent=0 // pred_fallthru
    _
  // Predicated region
  $region6: #{_lambda_.3} parent=0 // pred_check
    _
  $region7: #{_lambda_.3} parent=0 // pred_check_branch
    %11 = sbr.rel (0) target = $region9
  $region8: #{_lambda_.3} parent=0 // pred_region
    _
  $region9: #{_lambda_.3} parent=0 // pred_fallthru
    _
  // Predicated region
  $region10: #{_lambda_.3} parent=0 // pred_check
    _
  $region11: #{_lambda_.3} parent=0 // pred_check_branch
    %13 = sbr.rel (0) target = $region13
  $region12: #{_lambda_.3} parent=0 // pred_region
    _
  $region13: #{_lambda_.3} parent=0 // pred_fallthru
    _
  %v15 = vld [vmem:[%s0] sm:$0xff]
  %v16 = vld [vmem:[%s0 + $0x8] sm:$0xff]
  %v17 = vld [vmem:[%s0 + $0x10] sm:$0xff]
  %v18 = vpack.c.bf16 %v16, %v15
  %v19 = vpack.c.bf16 %v17, %v17
  %v20 = vld [vmem:[%s1] sm:$0xff]
  %v21 = vld [vmem:[%s1 + $0x8] sm:$0xff]
  %v22 = vld [vmem:[%s1 + $0x10] sm:$0xff]
  %v23 = vld [vmem:[%s1 + $0x18] sm:$0xff]
  %v24 = vld [vmem:[%s1 + $0x20] sm:$0xff]
  %v25 = vld [vmem:[%s1 + $0x28] sm:$0xff]
  %v26 = vld [vmem:[%s1 + $0x30] sm:$0xff]
  %v27 = vld [vmem:[%s1 + $0x38] sm:$0xff]
  %v28 = vld [vmem:[%s1 + $0x40] sm:$0x11]
  %v29 = vld [vmem:[%s1 + $0x48] sm:$0x11]
  %v40 = vunpack.c.l.b16 %v20
  %v41 = vunpack.c.h.b16 %v20
  %v42 = vunpack.c.l.b16 %v21
  %v43 = vunpack.c.h.b16 %v21
  %v44 = vunpack.c.l.b16 %v22
  %v45 = vunpack.c.h.b16 %v22
  %v46 = vunpack.c.l.b16 %v23
  %v47 = vunpack.c.h.b16 %v23
  %v48 = vunpack.c.l.b16 %v24
  %v49 = vunpack.c.h.b16 %v24
  %v50 = vunpack.c.l.b16 %v25
  %v51 = vunpack.c.h.b16 %v25
  %v52 = vunpack.c.l.b16 %v26
  %v53 = vunpack.c.h.b16 %v26
  %v54 = vunpack.c.l.b16 %v27
  %v55 = vunpack.c.h.b16 %v27
  %v56 = vunpack.c.l.b16 %v28
  %v57 = vunpack.c.h.b16 %v28
  %v58 = vunpack.c.l.b16 %v29
  %v59 = vunpack.c.h.b16 %v29
  %v60 = vpack.c.b16 %v44, %v40
  %v61 = vpack.c.b16 %v45, %v41
  %v62 = vpack.c.b16 %v46, %v42
  %v63 = vpack.c.b16 %v47, %v43
  %v64 = vpack.c.b16 %v52, %v48
  %v65 = vpack.c.b16 %v53, %v49
  %v66 = vpack.c.b16 %v54, %v50
  %v67 = vpack.c.b16 %v55, %v51
  %v68 = vpack.c.b16 %v56, %v56
  %v69 = vpack.c.b16 %v57, %v57
  %v70 = vpack.c.b16 %v58, %v58
  %v71 = vpack.c.b16 %v59, %v59
  %vm80 = vcmask 269312
  %v82 = vsel %vm80, %v18, 0
  %v85 = vsel %vm80, %v19, 0
  %vm87 = vcmask 1040384
  %v88 = vsel 0, 4294967295, 65535
  %v89 = vsel %vm87, %v88, 0
  %v91 = vand.u32 %v68, %v89
  %v94 = vand.u32 %v69, %v89
  %v97 = vand.u32 %v70, %v89
  %v100 = vand.u32 %v71, %v89
  %102 = vmatpush.bf16.msra.mxu0 0
  %103 = vmatpush.bf16.msra.mxu0 0
  %104 = vmatpush.bf16.msra.mxu0 0
  %105 = vmatpush.bf16.msra.mxu0 0
  %106 = vmatpush.bf16.msra.mxu0 0
  %107 = vmatpush.bf16.msra.mxu0 %v91
  %108 = vmatpush.bf16.msra.mxu0 %v64
  %109 = vmatpush.bf16.msra.mxu0 %v60
  %110 = vmatmul.bf16.gmra.mxu0 %v82
  %v111 = vpop.f32.mrf.mxu0
  %v112 = vadd.f32 0.0, %v111
  %v113 = vpop.f32.mrf.mxu0
  %v114 = vadd.f32 0.0, %v113
  %115 = vmatmul.bf16.gmra.mxu0 %v85
  %v116 = vpop.f32.mrf.mxu0
  %v117 = vadd.f32 0.0, %v116
  %v118 = vpop.f32.mrf.mxu0
  %119 = vdwg.mxu0
  %120 = vmatpush.bf16.msra.mxu0 0
  %121 = vmatpush.bf16.msra.mxu0 0
  %122 = vmatpush.bf16.msra.mxu0 0
  %123 = vmatpush.bf16.msra.mxu0 0
  %124 = vmatpush.bf16.msra.mxu0 0
  %125 = vmatpush.bf16.msra.mxu0 %v94
  %126 = vmatpush.bf16.msra.mxu0 %v65
  %127 = vmatpush.bf16.msra.mxu0 %v61
  %128 = vmatmul.bf16.gmra.mxu0 %v82
  %v129 = vpop.f32.mrf.mxu0
  %v130 = vadd.f32 0.0, %v129
  %v131 = vpop.f32.mrf.mxu0
  %v132 = vadd.f32 0.0, %v131
  %133 = vmatmul.bf16.gmra.mxu0 %v85
  %v134 = vpop.f32.mrf.mxu0
  %v135 = vadd.f32 0.0, %v134
  %v136 = vpop.f32.mrf.mxu0
  %137 = vdwg.mxu0
  %138 = vmatpush.bf16.msra.mxu0 0
  %139 = vmatpush.bf16.msra.mxu0 0
  %140 = vmatpush.bf16.msra.mxu0 0
  %141 = vmatpush.bf16.msra.mxu0 0
  %142 = vmatpush.bf16.msra.mxu0 0
  %143 = vmatpush.bf16.msra.mxu0 %v97
  %144 = vmatpush.bf16.msra.mxu0 %v66
  %145 = vmatpush.bf16.msra.mxu0 %v62
  %146 = vmatmul.bf16.gmra.mxu0 %v82
  %v147 = vpop.f32.mrf.mxu0
  %v148 = vadd.f32 0.0, %v147
  %v149 = vpop.f32.mrf.mxu0
  %v150 = vadd.f32 0.0, %v149
  %151 = vmatmul.bf16.gmra.mxu0 %v85
  %v152 = vpop.f32.mrf.mxu0
  %v153 = vadd.f32 0.0, %v152
  %v154 = vpop.f32.mrf.mxu0
  %155 = vdwg.mxu0
  %156 = vmatpush.bf16.msra.mxu0 0
  %157 = vmatpush.bf16.msra.mxu0 0
  %158 = vmatpush.bf16.msra.mxu0 0
  %159 = vmatpush.bf16.msra.mxu0 0
  %160 = vmatpush.bf16.msra.mxu0 0
  %161 = vmatpush.bf16.msra.mxu0 %v100
  %162 = vmatpush.bf16.msra.mxu0 %v67
  %163 = vmatpush.bf16.msra.mxu0 %v63
  %164 = vmatmul.bf16.gmra.mxu0 %v82
  %v165 = vpop.f32.mrf.mxu0
  %v166 = vadd.f32 0.0, %v165
  %v167 = vpop.f32.mrf.mxu0
  %v168 = vadd.f32 0.0, %v167
  %169 = vmatmul.bf16.gmra.mxu0 %v85
  %v170 = vpop.f32.mrf.mxu0
  %v171 = vadd.f32 0.0, %v170
  %v172 = vpop.f32.mrf.mxu0
  %173 = vdwg.mxu0
  %v174 = vld [vmem:[%s2] sm:$0x3f]
  %v175 = vld [vmem:[%s2 + $0x8] sm:$0x3f]
  %v176 = vld [vmem:[%s2 + $0x10] sm:$0x3f]
  %v177 = vld [vmem:[%s2 + $0x18] sm:$0x3f]
  %v182 = vrot.slane %v174, 6
  %v183 = vrot.slane %v175, 6
  %v184 = vrot.slane %v176, 6
  %v185 = vrot.slane %v177, 6
  %v190 = vrot.slane %v174, 4
  %v191 = vrot.slane %v175, 4
  %v192 = vrot.slane %v176, 4
  %v193 = vrot.slane %v177, 4
  %vm198 = vcmask 1041408
  %v199 = vsel %vm198, %v174, %v182
  %v200 = vsel %vm198, %v175, %v183
  %v201 = vsel %vm198, %v176, %v184
  %v202 = vsel %vm198, %v177, %v185
  %vm203 = vcmask 1043456
  %v204 = vsel %vm203, %v199, %v190
  %v205 = vsel %vm203, %v200, %v191
  %v206 = vsel %vm203, %v201, %v192
  %v207 = vsel %vm203, %v202, %v193
  %v208 = vrot.slane %v174, 2
  %v209 = vrot.slane %v175, 2
  %v210 = vrot.slane %v176, 2
  %v211 = vrot.slane %v177, 2
  %v216 = vsel %vm198, %v208, %v174
  %v217 = vsel %vm198, %v209, %v175
  %v218 = vsel %vm198, %v210, %v176
  %v219 = vsel %vm198, %v211, %v177
  %v220 = vsel %vm203, %v216, %v182
  %v221 = vsel %vm203, %v217, %v183
  %v222 = vsel %vm203, %v218, %v184
  %v223 = vsel %vm203, %v219, %v185
  %v224 = vsel %vm198, %v190, %v208
  %v225 = vsel %vm198, %v191, %v209
  %v226 = vsel %vm198, %v192, %v210
  %v227 = vsel %vm198, %v193, %v211
  %v228 = vsel %vm203, %v224, %v174
  %v229 = vsel %vm203, %v225, %v175
  %v230 = vsel %vm203, %v226, %v176
  %v231 = vsel %vm203, %v227, %v177
  %v232 = vmul.f32 %v112, %v204
  %v233 = vmul.f32 %v130, %v205
  %v234 = vmul.f32 %v148, %v206
  %v235 = vmul.f32 %v166, %v207
  %v240 = vrot.slane %v220, 2
  %v241 = vrot.slane %v221, 2
  %v242 = vrot.slane %v222, 2
  %v243 = vrot.slane %v223, 2
  %v248 = vmul.f32 %v112, %v240
  %v249 = vmul.f32 %v130, %v241
  %v250 = vmul.f32 %v148, %v242
  %v251 = vmul.f32 %v166, %v243
  %v252 = vmul.f32 %v114, %v240
  %v253 = vmul.f32 %v132, %v241
  %v254 = vmul.f32 %v150, %v242
  %v255 = vmul.f32 %v168, %v243
  %v264 = vrot.slane %v248, 6
  %v265 = vrot.slane %v252, 6
  %v266 = vsel %vm198, %v264, %v265
  %v267 = vrot.slane %v249, 6
  %v268 = vrot.slane %v253, 6
  %v269 = vsel %vm198, %v267, %v268
  %v270 = vrot.slane %v250, 6
  %v271 = vrot.slane %v254, 6
  %v272 = vsel %vm198, %v270, %v271
  %v273 = vrot.slane %v251, 6
  %v274 = vrot.slane %v255, 6
  %v275 = vsel %vm198, %v273, %v274
  %v280 = vadd.f32 %v232, %v266
  %v281 = vadd.f32 %v233, %v269
  %v282 = vadd.f32 %v234, %v272
  %v283 = vadd.f32 %v235, %v275
  %v288 = vrot.slane %v228, 4
  %v289 = vrot.slane %v229, 4
  %v290 = vrot.slane %v230, 4
  %v291 = vrot.slane %v231, 4
  %v296 = vmul.f32 %v114, %v288
  %v297 = vmul.f32 %v132, %v289
  %v298 = vmul.f32 %v150, %v290
  %v299 = vmul.f32 %v168, %v291
  %v300 = vmul.f32 %v117, %v288
  %v301 = vmul.f32 %v135, %v289
  %v302 = vmul.f32 %v153, %v290
  %v303 = vmul.f32 %v171, %v291
  %v312 = vrot.slane %v296, 4
  %v313 = vrot.slane %v300, 4
  %v314 = vsel %vm203, %v312, %v313
  %v315 = vrot.slane %v297, 4
  %v316 = vrot.slane %v301, 4
  %v317 = vsel %vm203, %v315, %v316
  %v318 = vrot.slane %v298, 4
  %v319 = vrot.slane %v302, 4
  %v320 = vsel %vm203, %v318, %v319
  %v321 = vrot.slane %v299, 4
  %v322 = vrot.slane %v303, 4
  %v323 = vsel %vm203, %v321, %v322
  %v328 = vadd.f32 %v280, %v314
  %v329 = vadd.f32 %v281, %v317
  %v330 = vadd.f32 %v282, %v320
  %v331 = vadd.f32 %v283, %v323
  %v336 = vrot.slane %v117, 2
  %v337 = vrot.slane %v135, 2
  %v338 = vrot.slane %v153, 2
  %v339 = vrot.slane %v171, 2
  %v344 = vadd.f32 %v328, %v336
  %v345 = vadd.f32 %v329, %v337
  %v346 = vadd.f32 %v330, %v338
  %v347 = vadd.f32 %v331, %v339
  %348 = vst [vmem:[%s3] sm:$0x3f] %v344
  %349 = vst [vmem:[%s3 + $0x8] sm:$0x3f] %v345
  %350 = vst [vmem:[%s3 + $0x10] sm:$0x3f] %v346
  %351 = vst [vmem:[%s3 + $0x18] sm:$0x3f] %v347
  // Predicated region
  $region14: #{_lambda_.3} parent=0 // pred_check
    _
  $region15: #{_lambda_.3} parent=0 // pred_check_branch
    %353 = sbr.rel (0) target = $region17
  $region16: #{_lambda_.3} parent=0 // pred_region
    _
  $region17: #{_lambda_.3} parent=0 // pred_fallthru
    _
  // Predicated region
  $region18: #{_lambda_.3} parent=0 // pred_check
    _
  $region19: #{_lambda_.3} parent=0 // pred_check_branch
    %355 = sbr.rel (0) target = $region21
  $region20: #{_lambda_.3} parent=0 // pred_region
    _
  $region21: #{_lambda_.3} parent=0 // pred_fallthru
    _

</llo_original>
